<compile_context>
chip_gen: v6e
topology: v6e:2x2x1
jax: 0.10.0
libtpu: 0.0.40
codegen_flags: <defaults>
</compile_context>

<pallas_src>
import jax
import jax.numpy as jnp
from jax import lax
from jax.experimental import pallas as pl
from jax.experimental.pallas import tpu as pltpu


def _fused_basic_kernel(x_ref, w1_ref, w2_ref, w3_ref, b_ref, o_ref,
                        pad_in, pad_mid, col_in, col_mid):
    """One block of Nb images per grid step; all three conv3x3+ReLU fused.

    x_ref  : (Nb, H, Lin)        input slab (NHWC flattened over (W, C)), f32
    wX_ref : (3*L_in, L_out)     bf16 banded weights (dy taps stacked along K)
    b_ref  : (3, L_out)          per-layer biases tiled over W, f32
    o_ref  : (Nb, H, L_out)      lane-dense output slab, f32
    pad_*  : VMEM (H+32, L)      bf16 staging buffers; interior at row 16
                                 (bf16-tile aligned), halo rows at 15 / 16+H
    col_*  : VMEM (Nb*H, 3*L)    bf16 im2col slabs (one deep-K dot per layer)
    """
    Nb, H, Lin = x_ref.shape
    Lout = o_ref.shape[2]
    ROW0 = 16                  # interior start (aligned to packed-bf16 tile)
    TOP = ROW0 - 1             # top halo row
    BOT = ROW0 + H             # bottom halo row

    # Zero only the halo rows (interior is fully overwritten every step).
    # Done per step so it is safe under any core split of the parallel axis.
    pad_in[TOP:ROW0, :] = jnp.zeros((1, Lin), jnp.bfloat16)
    pad_in[BOT:BOT + 1, :] = jnp.zeros((1, Lin), jnp.bfloat16)
    pad_mid[TOP:ROW0, :] = jnp.zeros((1, Lout), jnp.bfloat16)
    pad_mid[BOT:BOT + 1, :] = jnp.zeros((1, Lout), jnp.bfloat16)

    def stage_and_im2col(pad_ref, col_ref, act_img_bf16, n, L):
        # Aligned interior store, then 3 vertically shifted reads -> aligned
        # lane-block stores building image n's rows of the im2col slab.
        pad_ref[ROW0:ROW0 + H, :] = act_img_bf16
        for dy in range(3):
            col_ref[n * H:(n + 1) * H, dy * L:(dy + 1) * L] = \
                pad_ref[TOP + dy:TOP + dy + H, :]

    def layer(col_ref, w_ref, bias_row):
        acc = jnp.dot(col_ref[...], w_ref[...],
                      preferred_element_type=jnp.float32)   # M=Nb*H, K=3*L
        return jnp.maximum(acc + bias_row, 0.0)              # f32 bias + ReLU

    # ---- layer 1 ----
    for n in range(Nb):
        stage_and_im2col(pad_in, col_in, x_ref[n].astype(jnp.bfloat16), n, Lin)
    act = layer(col_in, w1_ref, b_ref[0:1, :])

    # ---- layer 2 ----
    for n in range(Nb):
        stage_and_im2col(pad_mid, col_mid,
                         act[n * H:(n + 1) * H, :].astype(jnp.bfloat16), n, Lout)
    act = layer(col_mid, w2_ref, b_ref[1:2, :])

    # ---- layer 3 ----
    for n in range(Nb):
        stage_and_im2col(pad_mid, col_mid,
                         act[n * H:(n + 1) * H, :].astype(jnp.bfloat16), n, Lout)
    act = layer(col_mid, w3_ref, b_ref[2:3, :])

    for n in range(Nb):
        o_ref[n] = act[n * H:(n + 1) * H, :].astype(o_ref.dtype)


def band_weights(w_hwio, W):
    """Fold the 3 horizontal taps + horizontal SAME padding of a 3x3 conv into
    a block-banded matrix per vertical tap dy, then stack the 3 dy taps along K.

    w_hwio: (3, 3, Ci, Co)  ->  (3*W*Ci, W*Co) bf16 with
    rows [dy*W*Ci + u*Ci + ci], cols [v*Co + co] = w[dy, u-v+1, ci, co]
    when 0 <= u-v+1 <= 2, else 0.  Built once in the wrapper (plain JAX).
    """
    _, _, Ci, Co = w_hwio.shape
    u = jnp.arange(W)[:, None]          # input column
    v = jnp.arange(W)[None, :]          # output column
    shift = u - v + 1                   # kx tap index
    valid = ((shift >= 0) & (shift <= 2)).astype(w_hwio.dtype)
    kx = jnp.clip(shift, 0, 2)
    sel = w_hwio[:, kx, :, :] * valid[None, :, :, None, None]   # (3, W, W, Ci, Co)
    band = jnp.transpose(sel, (0, 1, 3, 2, 4)).reshape(3, W * Ci, W * Co)
    return band.reshape(3 * W * Ci, W * Co).astype(jnp.bfloat16)


def _pick_block_batch(N, H, rows_target=256):
    """Largest divisor of N with Nb*H <= rows_target (fill the MXU M dim),
    but keep >= 2 grid steps when N >= 2 so both v7x TensorCores get work."""
    best = 1
    for d in range(1, N + 1):
        if N % d:
            continue
        if d * H > max(rows_target, H):
            continue
        if N >= 2 and N // d < 2:
            continue
        best = d
    return best


def basic_forward_nhwc(x_nhwc, params):
    """Preferred entry point: NHWC in / NHWC out (no HBM transpose passes)."""
    N, H, W, Cin = x_nhwc.shape
    Cout = params[0][0].shape[-1]

    # Pad Cin so the layer-1 lane width W*Cin is a multiple of 128
    # (full vregs, full-K dot); padded channels carry zero weights.
    lane = 128
    if (W * Cin) % lane != 0 and lane % W == 0:
        Cin_p = (-(-(W * Cin) // lane)) * lane // W
    else:
        Cin_p = Cin
    Lin, Lout = W * Cin_p, W * Cout

    x = x_nhwc
    if Cin_p != Cin:
        x = jnp.pad(x, ((0, 0), (0, 0), (0, 0), (0, Cin_p - Cin)))
    x_slab = x.reshape(N, H, Lin)

    (w1, b1), (w2, b2), (w3, b3) = params
    if Cin_p != Cin:
        w1 = jnp.pad(w1, ((0, 0), (0, 0), (0, Cin_p - Cin), (0, 0)))
    w1b = band_weights(w1, W)                       # (3*Lin,  Lout) bf16
    w2b = band_weights(w2, W)                       # (3*Lout, Lout) bf16
    w3b = band_weights(w3, W)
    bias_rows = jnp.stack(
        [jnp.tile(b1, W), jnp.tile(b2, W), jnp.tile(b3, W)], axis=0)  # (3, Lout)

    Nb = _pick_block_batch(N, H)
    grid = (N // Nb,)

    flops = 2 * 9 * N * H * W * (Cin * Cout + 2 * Cout * Cout)
    bytes_accessed = int(
        x_slab.size * 4 + N * H * Lout * 4
        + grid[0] * (w1b.size + w2b.size + w3b.size) * 2
        + grid[0] * bias_rows.size * 4)

    out_slab = pl.pallas_call(
        _fused_basic_kernel,
        out_shape=jax.ShapeDtypeStruct((N, H, Lout), jnp.float32),
        grid=grid,
        in_specs=[
            pl.BlockSpec((Nb, H, Lin), lambda g: (g, 0, 0)),
            pl.BlockSpec(w1b.shape, lambda g: (0, 0)),
            pl.BlockSpec(w2b.shape, lambda g: (0, 0)),
            pl.BlockSpec(w3b.shape, lambda g: (0, 0)),
            pl.BlockSpec(bias_rows.shape, lambda g: (0, 0)),
        ],
        out_specs=pl.BlockSpec((Nb, H, Lout), lambda g: (g, 0, 0)),
        scratch_shapes=[
            pltpu.VMEM((H + 32, Lin), jnp.bfloat16),       # padded layer-1 input
            pltpu.VMEM((H + 32, Lout), jnp.bfloat16),      # padded intermediates
            pltpu.VMEM((Nb * H, 3 * Lin), jnp.bfloat16),   # im2col, layer 1
            pltpu.VMEM((Nb * H, 3 * Lout), jnp.bfloat16),  # im2col, layers 2-3
        ],
        compiler_params=pltpu.CompilerParams(dimension_semantics=("parallel",)),
        cost_estimate=pl.CostEstimate(flops=flops, transcendentals=0,
                                      bytes_accessed=bytes_accessed),
    )(x_slab, w1b, w2b, w3b, bias_rows)

    return out_slab.reshape(N, H, W, Cout)


def basic_forward(x_nchw, params):
    """NCHW boundary wrapper to match the PyTorch module.  The two transposes
    are real HBM passes; chain Basic blocks through basic_forward_nhwc."""
    x_nhwc = jnp.transpose(x_nchw, (0, 2, 3, 1))
    out_nhwc = basic_forward_nhwc(x_nhwc, params)
    return jnp.transpose(out_nhwc, (0, 3, 1, 2))


def basic_forward_ref(x_nchw, params):
    """Pure-JAX reference matching the kernel's numerics: weights AND the
    activations that feed each conv are rounded to bf16; accumulate in f32."""
    def rnd(a):
        return a.astype(jnp.bfloat16).astype(jnp.float32)

    x = rnd(x_nchw)
    y = x
    for w_hwio, b in params:
        y = lax.conv_general_dilated(
            x, rnd(w_hwio), window_strides=(1, 1), padding="SAME",
            dimension_numbers=("NCHW", "HWIO", "NCHW"),
            precision=lax.Precision.HIGHEST)
        y = jnp.maximum(y + b[None, :, None, None], 0.0)
        x = rnd(y)
    return y


def init_basic_params(key, in_ch, out_ch):
    """Deterministic synthetic weights for the 3 conv layers (HWIO layout)."""
    keys = jax.random.split(key, 6)
    shapes = [(3, 3, in_ch, out_ch), (3, 3, out_ch, out_ch), (3, 3, out_ch, out_ch)]
    params = []
    for i, shp in enumerate(shapes):
        fan_in = shp[0] * shp[1] * shp[2]
        w = jax.random.normal(keys[2 * i], shp, jnp.float32) * (1.0 / jnp.sqrt(fan_in))
        b = jax.random.normal(keys[2 * i + 1], (shp[3],), jnp.float32) * 0.01
        params.append((w, b))
    return params


if __name__ == "__main__":
    key = jax.random.PRNGKey(0)
    k_x, k_p = jax.random.split(key)

    batch, in_ch, out_ch, H, W = 2, 4, 8, 16, 16
    x = jax.random.normal(k_x, (batch, in_ch, H, W), jnp.float32)  # NCHW like PyTorch
    params = init_basic_params(k_p, in_ch, out_ch)

    out = jax.block_until_ready(basic_forward(x, params))
    assert out.shape == (batch, out_ch, H, W), out.shape

    ref = jax.block_until_ready(basic_forward_ref(x, params))
    err = float(jnp.max(jnp.abs(out - ref)))
    assert err < 2e-3, f"max abs err vs reference: {err}"

    print("KERNEL_OK")
</pallas_src>

<mosaic_0001>
module attributes {stable_mosaic.version = 11 : i64} {
  func.func @_fused_basic_kernel(%arg0: i32, %arg1: memref<1x16x128xf32, #tpu.memory_space<vmem>>, %arg2: memref<384x128xbf16, #tpu.memory_space<vmem>>, %arg3: memref<384x128xbf16, #tpu.memory_space<vmem>>, %arg4: memref<384x128xbf16, #tpu.memory_space<vmem>>, %arg5: memref<3x128xf32, #tpu.memory_space<vmem>>, %arg6: memref<1x16x128xf32, #tpu.memory_space<vmem>>, %arg7: memref<48x128xbf16, #tpu.memory_space<vmem>>, %arg8: memref<48x128xbf16, #tpu.memory_space<vmem>>, %arg9: memref<16x384xbf16, #tpu.memory_space<vmem>>, %arg10: memref<16x384xbf16, #tpu.memory_space<vmem>>) attributes {dimension_semantics = [#tpu.dimension_semantics<parallel>], iteration_bounds = array<i64: 2>, scalar_prefetch = 0 : i64, scratch_operands = 4 : i64, tpu.core_type = #tpu.core_type<tc>, window_params = [{transform_indices = @transform_0, window_bounds = array<i64: 1, 16, 128>}, {pipeline_mode = #tpu.pipeline_mode<synchronous>, transform_indices = @transform_1, window_bounds = array<i64: 384, 128>}, {pipeline_mode = #tpu.pipeline_mode<synchronous>, transform_indices = @transform_2, window_bounds = array<i64: 384, 128>}, {pipeline_mode = #tpu.pipeline_mode<synchronous>, transform_indices = @transform_3, window_bounds = array<i64: 384, 128>}, {pipeline_mode = #tpu.pipeline_mode<synchronous>, transform_indices = @transform_4, window_bounds = array<i64: 3, 128>}, {transform_indices = @transform_5, window_bounds = array<i64: 1, 16, 128>}]} {
    %cst = arith.constant 0.000000e+00 : bf16
    %0 = vector.broadcast %cst : bf16 to vector<1x128xbf16>
    %c15 = arith.constant 15 : index
    %c0 = arith.constant 0 : index
    %1 = vector.load %arg7[%c15, %c0] : memref<48x128xbf16, #tpu.memory_space<vmem>>, vector<1x128xbf16>
    tpu.vector_store %arg7[%c15, %c0], %0 {strides = array<i32>} : memref<48x128xbf16, #tpu.memory_space<vmem>>, vector<1x128xbf16>,
    %cst_0 = arith.constant 0.000000e+00 : bf16
    %2 = vector.broadcast %cst_0 : bf16 to vector<1x128xbf16>
    %c32 = arith.constant 32 : index
    %c0_1 = arith.constant 0 : index
    %3 = vector.load %arg7[%c32, %c0_1] : memref<48x128xbf16, #tpu.memory_space<vmem>>, vector<1x128xbf16>
    tpu.vector_store %arg7[%c32, %c0_1], %2 {strides = array<i32>} : memref<48x128xbf16, #tpu.memory_space<vmem>>, vector<1x128xbf16>,
    %cst_2 = arith.constant 0.000000e+00 : bf16
    %4 = vector.broadcast %cst_2 : bf16 to vector<1x128xbf16>
    %c15_3 = arith.constant 15 : index
    %c0_4 = arith.constant 0 : index
    %5 = vector.load %arg8[%c15_3, %c0_4] : memref<48x128xbf16, #tpu.memory_space<vmem>>, vector<1x128xbf16>
    tpu.vector_store %arg8[%c15_3, %c0_4], %4 {strides = array<i32>} : memref<48x128xbf16, #tpu.memory_space<vmem>>, vector<1x128xbf16>,
    %cst_5 = arith.constant 0.000000e+00 : bf16
    %6 = vector.broadcast %cst_5 : bf16 to vector<1x128xbf16>
    %c32_6 = arith.constant 32 : index
    %c0_7 = arith.constant 0 : index
    %7 = vector.load %arg8[%c32_6, %c0_7] : memref<48x128xbf16, #tpu.memory_space<vmem>>, vector<1x128xbf16>
    tpu.vector_store %arg8[%c32_6, %c0_7], %6 {strides = array<i32>} : memref<48x128xbf16, #tpu.memory_space<vmem>>, vector<1x128xbf16>,
    %c0_8 = arith.constant 0 : index
    %c0_9 = arith.constant 0 : index
    %c0_10 = arith.constant 0 : index
    %8 = vector.load %arg1[%c0_8, %c0_9, %c0_10] : memref<1x16x128xf32, #tpu.memory_space<vmem>>, vector<1x16x128xf32>
    %9 = vector.shape_cast %8 : vector<1x16x128xf32> to vector<16x128xf32>
    %10 = arith.truncf %9 : vector<16x128xf32> to vector<16x128xbf16>
    %c16 = arith.constant 16 : index
    %c0_11 = arith.constant 0 : index
    %11 = vector.load %arg7[%c16, %c0_11] : memref<48x128xbf16, #tpu.memory_space<vmem>>, vector<16x128xbf16>
    tpu.vector_store %arg7[%c16, %c0_11], %10 {strides = array<i32>} : memref<48x128xbf16, #tpu.memory_space<vmem>>, vector<16x128xbf16>,
    %c15_12 = arith.constant 15 : index
    %c0_13 = arith.constant 0 : index
    %12 = vector.load %arg7[%c15_12, %c0_13] : memref<48x128xbf16, #tpu.memory_space<vmem>>, vector<16x128xbf16>
    %c0_14 = arith.constant 0 : index
    %c0_15 = arith.constant 0 : index
    %13 = vector.load %arg9[%c0_14, %c0_15] : memref<16x384xbf16, #tpu.memory_space<vmem>>, vector<16x128xbf16>
    tpu.vector_store %arg9[%c0_14, %c0_15], %12 {strides = array<i32>} : memref<16x384xbf16, #tpu.memory_space<vmem>>, vector<16x128xbf16>,
    %c16_16 = arith.constant 16 : index
    %c0_17 = arith.constant 0 : index
    %14 = vector.load %arg7[%c16_16, %c0_17] : memref<48x128xbf16, #tpu.memory_space<vmem>>, vector<16x128xbf16>
    %c0_18 = arith.constant 0 : index
    %c128 = arith.constant 128 : index
    %15 = vector.load %arg9[%c0_18, %c128] : memref<16x384xbf16, #tpu.memory_space<vmem>>, vector<16x128xbf16>
    tpu.vector_store %arg9[%c0_18, %c128], %14 {strides = array<i32>} : memref<16x384xbf16, #tpu.memory_space<vmem>>, vector<16x128xbf16>,
    %c17 = arith.constant 17 : index
    %c0_19 = arith.constant 0 : index
    %16 = vector.load %arg7[%c17, %c0_19] : memref<48x128xbf16, #tpu.memory_space<vmem>>, vector<16x128xbf16>
    %c0_20 = arith.constant 0 : index
    %c256 = arith.constant 256 : index
    %17 = vector.load %arg9[%c0_20, %c256] : memref<16x384xbf16, #tpu.memory_space<vmem>>, vector<16x128xbf16>
    tpu.vector_store %arg9[%c0_20, %c256], %16 {strides = array<i32>} : memref<16x384xbf16, #tpu.memory_space<vmem>>, vector<16x128xbf16>,
    %c0_21 = arith.constant 0 : index
    %c0_22 = arith.constant 0 : index
    %18 = vector.load %arg5[%c0_21, %c0_22] : memref<3x128xf32, #tpu.memory_space<vmem>>, vector<1x128xf32>
    %c0_23 = arith.constant 0 : index
    %c0_24 = arith.constant 0 : index
    %19 = vector.load %arg9[%c0_23, %c0_24] : memref<16x384xbf16, #tpu.memory_space<vmem>>, vector<16x384xbf16>
    %c0_25 = arith.constant 0 : index
    %c0_26 = arith.constant 0 : index
    %20 = vector.load %arg2[%c0_25, %c0_26] : memref<384x128xbf16, #tpu.memory_space<vmem>>, vector<384x128xbf16>
    %cst_27 = arith.constant dense<0.000000e+00> : vector<16x128xf32>
    %21 = tpu.matmul %19, %20, %cst_27 {dimension_numbers = #tpu.dot_dimension_numbers<[1], [0], [0], [1], [0, 0, 1, 1], [], []>} : vector<16x384xbf16>, vector<384x128xbf16>, vector<16x128xf32> -> vector<16x128xf32>
    %22 = vector.broadcast %18 : vector<1x128xf32> to vector<16x128xf32>
    %23 = arith.addf %21, %22 : vector<16x128xf32>
    %cst_28 = arith.constant 0.000000e+00 : f32
    %24 = vector.broadcast %cst_28 : f32 to vector<16x128xf32>
    %25 = arith.maximumf %23, %24 : vector<16x128xf32>
    %26 = arith.truncf %25 : vector<16x128xf32> to vector<16x128xbf16>
    %c16_29 = arith.constant 16 : index
    %c0_30 = arith.constant 0 : index
    %27 = vector.load %arg8[%c16_29, %c0_30] : memref<48x128xbf16, #tpu.memory_space<vmem>>, vector<16x128xbf16>
    tpu.vector_store %arg8[%c16_29, %c0_30], %26 {strides = array<i32>} : memref<48x128xbf16, #tpu.memory_space<vmem>>, vector<16x128xbf16>,
    %c15_31 = arith.constant 15 : index
    %c0_32 = arith.constant 0 : index
    %28 = vector.load %arg8[%c15_31, %c0_32] : memref<48x128xbf16, #tpu.memory_space<vmem>>, vector<16x128xbf16>
    %c0_33 = arith.constant 0 : index
    %c0_34 = arith.constant 0 : index
    %29 = vector.load %arg10[%c0_33, %c0_34] : memref<16x384xbf16, #tpu.memory_space<vmem>>, vector<16x128xbf16>
    tpu.vector_store %arg10[%c0_33, %c0_34], %28 {strides = array<i32>} : memref<16x384xbf16, #tpu.memory_space<vmem>>, vector<16x128xbf16>,
    %c16_35 = arith.constant 16 : index
    %c0_36 = arith.constant 0 : index
    %30 = vector.load %arg8[%c16_35, %c0_36] : memref<48x128xbf16, #tpu.memory_space<vmem>>, vector<16x128xbf16>
    %c0_37 = arith.constant 0 : index
    %c128_38 = arith.constant 128 : index
    %31 = vector.load %arg10[%c0_37, %c128_38] : memref<16x384xbf16, #tpu.memory_space<vmem>>, vector<16x128xbf16>
    tpu.vector_store %arg10[%c0_37, %c128_38], %30 {strides = array<i32>} : memref<16x384xbf16, #tpu.memory_space<vmem>>, vector<16x128xbf16>,
    %c17_39 = arith.constant 17 : index
    %c0_40 = arith.constant 0 : index
    %32 = vector.load %arg8[%c17_39, %c0_40] : memref<48x128xbf16, #tpu.memory_space<vmem>>, vector<16x128xbf16>
    %c0_41 = arith.constant 0 : index
    %c256_42 = arith.constant 256 : index
    %33 = vector.load %arg10[%c0_41, %c256_42] : memref<16x384xbf16, #tpu.memory_space<vmem>>, vector<16x128xbf16>
    tpu.vector_store %arg10[%c0_41, %c256_42], %32 {strides = array<i32>} : memref<16x384xbf16, #tpu.memory_space<vmem>>, vector<16x128xbf16>,
    %c1 = arith.constant 1 : index
    %c0_43 = arith.constant 0 : index
    %34 = vector.load %arg5[%c1, %c0_43] : memref<3x128xf32, #tpu.memory_space<vmem>>, vector<1x128xf32>
    %c0_44 = arith.constant 0 : index
    %c0_45 = arith.constant 0 : index
    %35 = vector.load %arg10[%c0_44, %c0_45] : memref<16x384xbf16, #tpu.memory_space<vmem>>, vector<16x384xbf16>
    %c0_46 = arith.constant 0 : index
    %c0_47 = arith.constant 0 : index
    %36 = vector.load %arg3[%c0_46, %c0_47] : memref<384x128xbf16, #tpu.memory_space<vmem>>, vector<384x128xbf16>
    %cst_48 = arith.constant dense<0.000000e+00> : vector<16x128xf32>
    %37 = tpu.matmul %35, %36, %cst_48 {dimension_numbers = #tpu.dot_dimension_numbers<[1], [0], [0], [1], [0, 0, 1, 1], [], []>} : vector<16x384xbf16>, vector<384x128xbf16>, vector<16x128xf32> -> vector<16x128xf32>
    %38 = vector.broadcast %34 : vector<1x128xf32> to vector<16x128xf32>
    %39 = arith.addf %37, %38 : vector<16x128xf32>
    %cst_49 = arith.constant 0.000000e+00 : f32
    %40 = vector.broadcast %cst_49 : f32 to vector<16x128xf32>
    %41 = arith.maximumf %39, %40 : vector<16x128xf32>
    %42 = arith.truncf %41 : vector<16x128xf32> to vector<16x128xbf16>
    %c16_50 = arith.constant 16 : index
    %c0_51 = arith.constant 0 : index
    %43 = vector.load %arg8[%c16_50, %c0_51] : memref<48x128xbf16, #tpu.memory_space<vmem>>, vector<16x128xbf16>
    tpu.vector_store %arg8[%c16_50, %c0_51], %42 {strides = array<i32>} : memref<48x128xbf16, #tpu.memory_space<vmem>>, vector<16x128xbf16>,
    %c15_52 = arith.constant 15 : index
    %c0_53 = arith.constant 0 : index
    %44 = vector.load %arg8[%c15_52, %c0_53] : memref<48x128xbf16, #tpu.memory_space<vmem>>, vector<16x128xbf16>
    %c0_54 = arith.constant 0 : index
    %c0_55 = arith.constant 0 : index
    %45 = vector.load %arg10[%c0_54, %c0_55] : memref<16x384xbf16, #tpu.memory_space<vmem>>, vector<16x128xbf16>
    tpu.vector_store %arg10[%c0_54, %c0_55], %44 {strides = array<i32>} : memref<16x384xbf16, #tpu.memory_space<vmem>>, vector<16x128xbf16>,
    %c16_56 = arith.constant 16 : index
    %c0_57 = arith.constant 0 : index
    %46 = vector.load %arg8[%c16_56, %c0_57] : memref<48x128xbf16, #tpu.memory_space<vmem>>, vector<16x128xbf16>
    %c0_58 = arith.constant 0 : index
    %c128_59 = arith.constant 128 : index
    %47 = vector.load %arg10[%c0_58, %c128_59] : memref<16x384xbf16, #tpu.memory_space<vmem>>, vector<16x128xbf16>
    tpu.vector_store %arg10[%c0_58, %c128_59], %46 {strides = array<i32>} : memref<16x384xbf16, #tpu.memory_space<vmem>>, vector<16x128xbf16>,
    %c17_60 = arith.constant 17 : index
    %c0_61 = arith.constant 0 : index
    %48 = vector.load %arg8[%c17_60, %c0_61] : memref<48x128xbf16, #tpu.memory_space<vmem>>, vector<16x128xbf16>
    %c0_62 = arith.constant 0 : index
    %c256_63 = arith.constant 256 : index
    %49 = vector.load %arg10[%c0_62, %c256_63] : memref<16x384xbf16, #tpu.memory_space<vmem>>, vector<16x128xbf16>
    tpu.vector_store %arg10[%c0_62, %c256_63], %48 {strides = array<i32>} : memref<16x384xbf16, #tpu.memory_space<vmem>>, vector<16x128xbf16>,
    %c2 = arith.constant 2 : index
    %c0_64 = arith.constant 0 : index
    %50 = vector.load %arg5[%c2, %c0_64] : memref<3x128xf32, #tpu.memory_space<vmem>>, vector<1x128xf32>
    %c0_65 = arith.constant 0 : index
    %c0_66 = arith.constant 0 : index
    %51 = vector.load %arg10[%c0_65, %c0_66] : memref<16x384xbf16, #tpu.memory_space<vmem>>, vector<16x384xbf16>
    %c0_67 = arith.constant 0 : index
    %c0_68 = arith.constant 0 : index
    %52 = vector.load %arg4[%c0_67, %c0_68] : memref<384x128xbf16, #tpu.memory_space<vmem>>, vector<384x128xbf16>
    %cst_69 = arith.constant dense<0.000000e+00> : vector<16x128xf32>
    %53 = tpu.matmul %51, %52, %cst_69 {dimension_numbers = #tpu.dot_dimension_numbers<[1], [0], [0], [1], [0, 0, 1, 1], [], []>} : vector<16x384xbf16>, vector<384x128xbf16>, vector<16x128xf32> -> vector<16x128xf32>
    %54 = vector.broadcast %50 : vector<1x128xf32> to vector<16x128xf32>
    %55 = arith.addf %53, %54 : vector<16x128xf32>
    %cst_70 = arith.constant 0.000000e+00 : f32
    %56 = vector.broadcast %cst_70 : f32 to vector<16x128xf32>
    %57 = arith.maximumf %55, %56 : vector<16x128xf32>
    %c0_71 = arith.constant 0 : index
    %c0_72 = arith.constant 0 : index
    %c0_73 = arith.constant 0 : index
    %58 = vector.load %arg6[%c0_71, %c0_72, %c0_73] : memref<1x16x128xf32, #tpu.memory_space<vmem>>, vector<1x16x128xf32>
    %59 = vector.shape_cast %58 : vector<1x16x128xf32> to vector<16x128xf32>
    %60 = vector.shape_cast %57 : vector<16x128xf32> to vector<1x16x128xf32>
    tpu.vector_store %arg6[%c0_71, %c0_72, %c0_73], %60 {strides = array<i32>} : memref<1x16x128xf32, #tpu.memory_space<vmem>>, vector<1x16x128xf32>,
    return
  }
  func.func @transform_0(%arg0: i32) -> (i32, i32, i32) {
    %c0_i32 = arith.constant 0 : i32
    %c0_i32_0 = arith.constant 0 : i32
    %c0_i32_1 = arith.constant 0 : i32
    return %arg0, %c0_i32, %c0_i32_0 : i32, i32, i32
  }
  func.func @transform_1(%arg0: i32) -> (i32, i32) {
    %c0_i32 = arith.constant 0 : i32
    %c0_i32_0 = arith.constant 0 : i32
    %c0_i32_1 = arith.constant 0 : i32
    return %c0_i32, %c0_i32_0 : i32, i32
  }
  func.func @transform_2(%arg0: i32) -> (i32, i32) {
    %c0_i32 = arith.constant 0 : i32
    %c0_i32_0 = arith.constant 0 : i32
    %c0_i32_1 = arith.constant 0 : i32
    return %c0_i32, %c0_i32_0 : i32, i32
  }
  func.func @transform_3(%arg0: i32) -> (i32, i32) {
    %c0_i32 = arith.constant 0 : i32
    %c0_i32_0 = arith.constant 0 : i32
    %c0_i32_1 = arith.constant 0 : i32
    return %c0_i32, %c0_i32_0 : i32, i32
  }
  func.func @transform_4(%arg0: i32) -> (i32, i32) {
    %c0_i32 = arith.constant 0 : i32
    %c0_i32_0 = arith.constant 0 : i32
    %c0_i32_1 = arith.constant 0 : i32
    return %c0_i32, %c0_i32_0 : i32, i32
  }
  func.func @transform_5(%arg0: i32) -> (i32, i32, i32) {
    %c0_i32 = arith.constant 0 : i32
    %c0_i32_0 = arith.constant 0 : i32
    %c0_i32_1 = arith.constant 0 : i32
    return %arg0, %c0_i32, %c0_i32_0 : i32, i32, i32
  }
}

</mosaic_0001>

<llo_original>
// kernel: tpu_custom_call.1
$region0: #{tpu_custom_call.1}
  #allocation0 [shape = 'u32[]', space=smem, size = 0x4, offset = 0x4, fixed_abs, tag = 'smem constant byte address 0x4 - core index']
  #allocation1 [shape = 'u32[144,128]{1,0:T(1,128)}', space=vmem, size = 0x12000, scoped, tag = 'internal scratch']
  #allocation2 [shape = 'bf16[48,128]{1,0:T(8,128)(2,1)}', space=vmem, size = 0x3000, scoped, tag = 'scratch operand']
  #allocation3 [shape = 'bf16[48,128]{1,0:T(8,128)(2,1)}', space=vmem, size = 0x3000, scoped, tag = 'scratch operand']
  #allocation4 [shape = 'bf16[16,384]{1,0:T(8,128)(2,1)}', space=vmem, size = 0x3000, scoped, tag = 'scratch operand']
  #allocation5 [shape = 'bf16[16,384]{1,0:T(8,128)(2,1)}', space=vmem, size = 0x3000, scoped, tag = 'scratch operand']
  %s0 = inlined_call_operand.hbm [shape: f32[2,16,128], index: 0, kind: input, shape index: {}]
  %s1 = inlined_call_operand.hbm [shape: bf16[384,128], index: 1, kind: input, shape index: {}]
  %s2 = inlined_call_operand.hbm [shape: bf16[384,128], index: 2, kind: input, shape index: {}]
  %s3 = inlined_call_operand.hbm [shape: bf16[384,128], index: 3, kind: input, shape index: {}]
  %s4 = inlined_call_operand.vmem [shape: f32[3,128], index: 4, kind: input, shape index: {}]
  %s5 = inlined_call_operand.hbm [shape: f32[2,16,128], index: 5, kind: output, shape index: {}]
  %s6 = sld [smem:[#allocation0]]
  $region69: #{tpu_custom_call.1} parent=0
    _
  %s8 = ssub.s32 1, %s6
  %s9 = scalar_select 0, %s8, %s6
  $region1: #{tpu_custom_call.1} parent=0
    #allocation6 [shape = 'u8[16384]{0}', space=vmem, size = 0x4000, scoped, tag = 'input window, operand 0']
    #allocation7 [shape = 's32[2]{0}', space=sflag, size = 0x8, scoped, tag = 'scoped memory for tpu_custom_call.1']
    #allocation8 [shape = 's32[2]{0}', space=sflag, size = 0x8, scoped, tag = 'scoped memory for tpu_custom_call.1']
    #allocation9 [shape = 'u8[98304]{0}', space=vmem, size = 0x18000, scoped, tag = 'input window, operand 1, single buffered']
    #allocation10 [shape = 's32[1]{0}', space=sflag, size = 0x4, scoped, tag = 'scoped memory for tpu_custom_call.1']
    #allocation11 [shape = 'u8[98304]{0}', space=vmem, size = 0x18000, scoped, tag = 'input window, operand 2, single buffered']
    #allocation12 [shape = 'u8[98304]{0}', space=vmem, size = 0x18000, scoped, tag = 'input window, operand 3, single buffered']
    #allocation13 [shape = 's32[1]{0}', space=sflag, size = 0x4, scoped, tag = 'scoped memory for tpu_custom_call.1']
    #allocation14 [shape = 'u8[16384]{0}', space=vmem, size = 0x4000, scoped, tag = 'output window, operand 0']
    %10 = vsyncpa [#allocation7], 0
    %s11 = scalar_lea.sflag [#allocation7], 1
    %12 = vsyncpa %s11, 0
    %13 = vsyncpa [#allocation10], 0
    %14 = vsyncpa [#allocation13], 0
    %15 = vsyncpa [#allocation8], 0
    %s16 = scalar_lea.sflag [#allocation8], 1
    %17 = vsyncpa %s16, 0
    loop: start=0, step=1, limit=4
    $region2: #{tpu_custom_call.1} parent=1 // loop_pre_header
      _
    $region3: #{tpu_custom_call.1} parent=1 // loop_header
      %s19 = sphi 0, %s23
      %p20 = scmp.ge.s32.totalorder %s19, 4
      %s29 = sphi 0, %s31
      %s32 = sphi 0, %s29
      %s33 = sphi 0, %s32
      %s49 = sphi 0, %s33
      %s53 = sphi 0, %s53
      %s55 = sphi 0, %s53
      %s56 = sphi 0, %s55
      %s70 = sphi 0, %s56
      %s74 = sphi 0, %s74
      %s76 = sphi 0, %s74
      %s77 = sphi 0, %s76
      %s91 = sphi 0, %s77
      %s95 = sphi 0, %s95
      %s97 = sphi 0, %s95
      %s98 = sphi 0, %s97
      %s112 = sphi 0, %s98
      %s116 = sphi 0, %s116
      %s118 = sphi 0, %s116
      %s119 = sphi 0, %s118
      %s133 = sphi 0, %s119
      %s139 = sphi 0, %s141
      %s142 = sphi 0, %s139
      %s143 = sphi 0, %s142
      %s159 = sphi 0, %s143
    $region4: #{tpu_custom_call.1} parent=1 // loop_header_branch
      %22 = sbr.rel (%p20) target = $region8
    $region5: #{tpu_custom_call.1} parent=1 // loop_body
      %s24 = ssub.s32 %s19, 1
      %s25 = ssub.s32 %s19, 2
      %s26 = sadd.s32 %s19, 1
      %s27 = ssub.s32 %s19, %s26
      %p28 = scmp.eq.s32.totalorder %s27, 0
      %s30 = sadd.s32 %s29, 1
      %s31 = scalar_select %p28, %s29, %s30
      %p34 = pneg %p28
      %p35 = scmp.eq.s32.totalorder %s19, 1
      %p36 = por %p34, %p35
      %p37 = scmp.ne.s32.totalorder %s29, %s32
      %p38 = scmp.eq.s32.totalorder %s19, 0
      %p39 = por %p37, %p38
      %p40 = scmp.ne.s32.totalorder %s29, %s32
      %p41 = scmp.eq.s32.totalorder %s24, 1
      %p42 = por %p40, %p41
      %p43 = scmp.ne.s32.totalorder %s32, %s33
      %p44 = scmp.eq.s32.totalorder %s24, 0
      %p45 = por %p43, %p44
      %p46 = scmp.ne.s32.totalorder %s32, %s33
      %p47 = scmp.eq.s32.totalorder %s25, 1
      %p48 = por %p46, %p47
      %p50 = scmp.ne.s32.totalorder %s33, %s49
      %p51 = scmp.eq.s32.totalorder %s25, 0
      %p52 = por %p50, %p51
      %s54 = sadd.s32 %s53, 1
      %p57 = scmp.eq.s32.totalorder %s19, 1
      %p58 = scmp.ne.s32.totalorder %s53, %s55
      %p59 = scmp.eq.s32.totalorder %s19, 0
      %p60 = por %p58, %p59
      %p61 = scmp.ne.s32.totalorder %s53, %s55
      %p62 = scmp.eq.s32.totalorder %s24, 1
      %p63 = por %p61, %p62
      %p64 = scmp.ne.s32.totalorder %s55, %s56
      %p65 = scmp.eq.s32.totalorder %s24, 0
      %p66 = por %p64, %p65
      %p67 = scmp.ne.s32.totalorder %s55, %s56
      %p68 = scmp.eq.s32.totalorder %s25, 1
      %p69 = por %p67, %p68
      %p71 = scmp.ne.s32.totalorder %s56, %s70
      %p72 = scmp.eq.s32.totalorder %s25, 0
      %p73 = por %p71, %p72
      %s75 = sadd.s32 %s74, 1
      %p78 = scmp.eq.s32.totalorder %s19, 1
      %p79 = scmp.ne.s32.totalorder %s74, %s76
      %p80 = scmp.eq.s32.totalorder %s19, 0
      %p81 = por %p79, %p80
      %p82 = scmp.ne.s32.totalorder %s74, %s76
      %p83 = scmp.eq.s32.totalorder %s24, 1
      %p84 = por %p82, %p83
      %p85 = scmp.ne.s32.totalorder %s76, %s77
      %p86 = scmp.eq.s32.totalorder %s24, 0
      %p87 = por %p85, %p86
      %p88 = scmp.ne.s32.totalorder %s76, %s77
      %p89 = scmp.eq.s32.totalorder %s25, 1
      %p90 = por %p88, %p89
      %p92 = scmp.ne.s32.totalorder %s77, %s91
      %p93 = scmp.eq.s32.totalorder %s25, 0
      %p94 = por %p92, %p93
      %s96 = sadd.s32 %s95, 1
      %p99 = scmp.eq.s32.totalorder %s19, 1
      %p100 = scmp.ne.s32.totalorder %s95, %s97
      %p101 = scmp.eq.s32.totalorder %s19, 0
      %p102 = por %p100, %p101
      %p103 = scmp.ne.s32.totalorder %s95, %s97
      %p104 = scmp.eq.s32.totalorder %s24, 1
      %p105 = por %p103, %p104
      %p106 = scmp.ne.s32.totalorder %s97, %s98
      %p107 = scmp.eq.s32.totalorder %s24, 0
      %p108 = por %p106, %p107
      %p109 = scmp.ne.s32.totalorder %s97, %s98
      %p110 = scmp.eq.s32.totalorder %s25, 1
      %p111 = por %p109, %p110
      %p113 = scmp.ne.s32.totalorder %s98, %s112
      %p114 = scmp.eq.s32.totalorder %s25, 0
      %p115 = por %p113, %p114
      %s117 = sadd.s32 %s116, 1
      %p120 = scmp.eq.s32.totalorder %s19, 1
      %p121 = scmp.ne.s32.totalorder %s116, %s118
      %p122 = scmp.eq.s32.totalorder %s19, 0
      %p123 = por %p121, %p122
      %p124 = scmp.ne.s32.totalorder %s116, %s118
      %p125 = scmp.eq.s32.totalorder %s24, 1
      %p126 = por %p124, %p125
      %p127 = scmp.ne.s32.totalorder %s118, %s119
      %p128 = scmp.eq.s32.totalorder %s24, 0
      %p129 = por %p127, %p128
      %p130 = scmp.ne.s32.totalorder %s118, %s119
      %p131 = scmp.eq.s32.totalorder %s25, 1
      %p132 = por %p130, %p131
      %p134 = scmp.ne.s32.totalorder %s119, %s133
      %p135 = scmp.eq.s32.totalorder %s25, 0
      %p136 = por %p134, %p135
      %s137 = ssub.s32 %s19, %s26
      %p138 = scmp.eq.s32.totalorder %s137, 0
      %s140 = sadd.s32 %s139, 1
      %s141 = scalar_select %p138, %s139, %s140
      %p144 = pneg %p138
      %p145 = scmp.eq.s32.totalorder %s19, 1
      %p146 = por %p144, %p145
      %p147 = scmp.ne.s32.totalorder %s139, %s142
      %p148 = scmp.eq.s32.totalorder %s19, 0
      %p149 = por %p147, %p148
      %p150 = scmp.ne.s32.totalorder %s139, %s142
      %p151 = scmp.eq.s32.totalorder %s24, 1
      %p152 = por %p150, %p151
      %p153 = scmp.ne.s32.totalorder %s142, %s143
      %p154 = scmp.eq.s32.totalorder %s24, 0
      %p155 = por %p153, %p154
      %p156 = scmp.ne.s32.totalorder %s142, %s143
      %p157 = scmp.eq.s32.totalorder %s25, 1
      %p158 = por %p156, %p157
      %p160 = scmp.ne.s32.totalorder %s143, %s159
      %p161 = scmp.eq.s32.totalorder %s25, 0
      %p162 = por %p160, %p161
      %p163 = scmp.le.s32.totalorder 1, %s19
      %p164 = scmp.lt.s32.totalorder %s19, 3
      %p165 = pnand %p163, %p164
      %p166 = pneg %p165
      // Predicated region
      $region9: #{tpu_custom_call.1} parent=5 // pred_check
        _
      $region10: #{tpu_custom_call.1} parent=5 // pred_check_branch
        %168 = sbr.rel (%p165) target = $region12
      $region11: #{tpu_custom_call.1} parent=5 // pred_region
        %s169 = ssub.s32 %s19, 1
        // Predicated region
        $region13: #{tpu_custom_call.1} parent=11 // pred_check
          %p170 = pneg %p66
        $region14: #{tpu_custom_call.1} parent=11 // pred_check_branch
          %172 = sbr.rel (%p170) target = $region16
        $region15: #{tpu_custom_call.1} parent=11 // pred_region
          %s174 = ssub.s32 3072, 3072
          %175 = vsyncadd [#allocation10], %s174
          %s176 = sshll.u32 [#allocation9], 4
          %s177 = int_to_ptr.vmem [resolvable:$true] %s176
          %182 = dma.hbm_to_vmem [thread:$0]  %s1, 3072, %s177, [#allocation10], 64, 64, 4
        $region16: #{tpu_custom_call.1} parent=11 // pred_fallthru
          _
        // Predicated region
        $region17: #{tpu_custom_call.1} parent=11 // pred_check
          %p183 = pneg %p87
        $region18: #{tpu_custom_call.1} parent=11 // pred_check_branch
          %185 = sbr.rel (%p183) target = $region20
        $region19: #{tpu_custom_call.1} parent=11 // pred_region
          %s187 = ssub.s32 3072, 3072
          %188 = vsyncadd [#allocation10], %s187
          %s189 = sshll.u32 [#allocation11], 4
          %s190 = int_to_ptr.vmem [resolvable:$true] %s189
          %195 = dma.hbm_to_vmem [thread:$0]  %s2, 3072, %s190, [#allocation10], 64, 64, 4
        $region20: #{tpu_custom_call.1} parent=11 // pred_fallthru
          _
        // Predicated region
        $region21: #{tpu_custom_call.1} parent=11 // pred_check
          %p196 = pneg %p108
        $region22: #{tpu_custom_call.1} parent=11 // pred_check_branch
          %198 = sbr.rel (%p196) target = $region24
        $region23: #{tpu_custom_call.1} parent=11 // pred_region
          %s200 = ssub.s32 3072, 3072
          %201 = vsyncadd [#allocation13], %s200
          %s202 = sshll.u32 [#allocation12], 4
          %s203 = int_to_ptr.vmem [resolvable:$true] %s202
          %208 = dma.hbm_to_vmem [thread:$0]  %s3, 3072, %s203, [#allocation13], 64, 64, 4
        $region24: #{tpu_custom_call.1} parent=11 // pred_fallthru
          _
        // Predicated region
        $region25: #{tpu_custom_call.1} parent=11 // pred_check
          %p209 = pneg %p129
        $region26: #{tpu_custom_call.1} parent=11 // pred_check_branch
          %211 = sbr.rel (%p209) target = $region28
        $region27: #{tpu_custom_call.1} parent=11 // pred_region
          _
        $region28: #{tpu_custom_call.1} parent=11 // pred_fallthru
          _
      $region12: #{tpu_custom_call.1} parent=5 // pred_fallthru
        _
      %p212 = scmp.lt.s32.totalorder %s19, 2
      // Predicated region
      $region29: #{tpu_custom_call.1} parent=5 // pred_check
        %p213 = pneg %p212
      $region30: #{tpu_custom_call.1} parent=5 // pred_check_branch
        %215 = sbr.rel (%p213) target = $region32
      $region31: #{tpu_custom_call.1} parent=5 // pred_region
        // Predicated region
        $region33: #{tpu_custom_call.1} parent=31 // pred_check
          %p216 = pneg %p39
        $region34: #{tpu_custom_call.1} parent=31 // pred_check_branch
          %218 = sbr.rel (%p216) target = $region36
        $region35: #{tpu_custom_call.1} parent=31 // pred_region
          %s219 = sand.u32 %s29, 1
          %s220 = scalar_lea.sflag [#allocation7], %s219
          %s221 = sand.u32 %s29, 1
          %s222 = smul.addr %s221, 16
          %s223 = scalar_lea.vmem [#allocation6], %s222
          %s225 = ssub.s32 256, 256
          %226 = vsyncadd %s220, %s225
          %s227 = smul.addr %s19, 2
          %s228 = smul.addr %s227, 128
          %s229 = scalar_lea.hbm %s0, %s228
          %s230 = sshll.u32 %s223, 4
          %s231 = int_to_ptr.vmem [resolvable:$true] %s230
          %236 = dma.hbm_to_vmem [thread:$0]  %s229, 256, %s231, %s220, 128, 128, 8
        $region36: #{tpu_custom_call.1} parent=31 // pred_fallthru
          _
      $region32: #{tpu_custom_call.1} parent=5 // pred_fallthru
        _
      %p237 = scmp.le.s32.totalorder 1, %s19
      %p238 = scmp.lt.s32.totalorder %s19, 3
      %p239 = pnand %p237, %p238
      %p240 = pneg %p239
      // Predicated region
      $region37: #{tpu_custom_call.1} parent=5 // pred_check
        _
      $region38: #{tpu_custom_call.1} parent=5 // pred_check_branch
        %242 = sbr.rel (%p239) target = $region40
      $region39: #{tpu_custom_call.1} parent=5 // pred_region
        %s243 = ssub.s32 %s19, 1
        %s244 = sand.u32 %s32, 1
        %s245 = scalar_lea.sflag [#allocation7], %s244
        %s246 = sand.u32 %s32, 1
        %s247 = smul.addr %s246, 16
        %s248 = scalar_lea.vmem [#allocation6], %s247
        // Predicated region
        $region41: #{tpu_custom_call.1} parent=39 // pred_check
          %p249 = pneg %p45
        $region42: #{tpu_custom_call.1} parent=39 // pred_check_branch
          %251 = sbr.rel (%p249) target = $region44
        $region43: #{tpu_custom_call.1} parent=39 // pred_region
          %252 = dma.done %s245, 256
        $region44: #{tpu_custom_call.1} parent=39 // pred_fallthru
          _
        // Predicated region
        $region45: #{tpu_custom_call.1} parent=39 // pred_check
          %p253 = pneg %p66
        $region46: #{tpu_custom_call.1} parent=39 // pred_check_branch
          %255 = sbr.rel (%p253) target = $region48
        $region47: #{tpu_custom_call.1} parent=39 // pred_region
          %256 = dma.done [#allocation10], 3072
        $region48: #{tpu_custom_call.1} parent=39 // pred_fallthru
          _
        // Predicated region
        $region49: #{tpu_custom_call.1} parent=39 // pred_check
          %p257 = pneg %p87
        $region50: #{tpu_custom_call.1} parent=39 // pred_check_branch
          %259 = sbr.rel (%p257) target = $region52
        $region51: #{tpu_custom_call.1} parent=39 // pred_region
          %260 = dma.done [#allocation10], 3072
        $region52: #{tpu_custom_call.1} parent=39 // pred_fallthru
          _
        // Predicated region
        $region53: #{tpu_custom_call.1} parent=39 // pred_check
          %p261 = pneg %p108
        $region54: #{tpu_custom_call.1} parent=39 // pred_check_branch
          %263 = sbr.rel (%p261) target = $region56
        $region55: #{tpu_custom_call.1} parent=39 // pred_region
          %264 = dma.done [#allocation13], 3072
        $region56: #{tpu_custom_call.1} parent=39 // pred_fallthru
          _
        %s265 = sand.u32 %s32, 1
        %s266 = scalar_lea.sflag [#allocation7], %s265
        %s267 = sand.u32 %s32, 1
        %s268 = smul.addr %s267, 16
        %s269 = scalar_lea.vmem [#allocation6], %s268
        %p270 = pneg %p45
        %p271 = pneg %p42
        %p272 = pneg %p66
        %p273 = pneg %p63
        %p274 = pneg %p87
        %p275 = pneg %p84
        %p276 = pneg %p108
        %p277 = pneg %p105
        %p278 = pneg %p129
        %p279 = pneg %p126
        %p280 = pneg %p155
        %p281 = pneg %p152
        %s282 = sand.u32 %s142, 1
        %s283 = scalar_lea.sflag [#allocation8], %s282
        %s284 = sand.u32 %s142, 1
        %s285 = smul.addr %s284, 16
        %s286 = scalar_lea.vmem [#allocation14], %s285
        %vm288 = vcmask 1043459
        %vm289 = vsmask.f32 7950
        %vm290 = vmand %vm288, %vm289
        %v291 = vld [vmem:[#allocation2 + $0x4] sm:$0x8]
        %v292 = vsel %vm290, 0, %v291
        %293 = vst [vmem:[#allocation2 + $0x4] sm:$0x8] %v292
        %vm294 = vcmask 1040384
        %vm295 = vsmask.f32 256
        %vm296 = vmand %vm294, %vm295
        %v297 = vld [vmem:[#allocation2 + $0x10] sm:$0x1]
        %v298 = vsel %vm296, 0, %v297
        %299 = vst [vmem:[#allocation2 + $0x10] sm:$0x1] %v298
        %v300 = vld [vmem:[#allocation3 + $0x4] sm:$0x8]
        %v301 = vsel %vm290, 0, %v300
        %302 = vst [vmem:[#allocation3 + $0x4] sm:$0x8] %v301
        %v303 = vld [vmem:[#allocation3 + $0x10] sm:$0x1]
        %v304 = vsel %vm296, 0, %v303
        %305 = vst [vmem:[#allocation3 + $0x10] sm:$0x1] %v304
        %v306 = vld [vmem:[%s248] sm:$0xff]
        %v307 = vld [vmem:[%s248 + $0x8] sm:$0xff]
        %v308 = vpack.c.bf16 %v307, %v306
        %v310 = vunpack.c.l.b16 %v308
        %v311 = vunpack.c.h.b16 %v308
        %v312 = vpack.c.b16 %v310, %v310
        %v313 = vpack.c.b16 %v311, %v311
        %316 = vst [vmem:[#allocation2 + $0x8] sm:$0xf] %v312
        %317 = vst [vmem:[#allocation2 + $0xc] sm:$0xf] %v313
        %v318 = vld [vmem:[#allocation2 + $0x4] sm:$0x8]
        %v319 = vld [vmem:[#allocation2 + $0x8] sm:$0xf]
        %v320 = vld [vmem:[#allocation2 + $0xc] sm:$0xf]
        %vm321 = vsmask.f32 4368
        %vm322 = vmor %vm295, %vm321
        %v324 = vshrl.u32 %v318, 16
        %v326 = vrot.slane %v324, 7
        %v327 = vrot.slane %v326, 4
        %v329 = vshrl.u32 %v319, 16
        %v331 = vrot.slane %v329, 7
        %v332 = vshll.u32 %v319, 16
        %v334 = vor.u32 %v331, %v332
        %v335 = vsel %vm322, %v327, %v334
        %v336 = vrot.slane %v331, 4
        %v338 = vshrl.u32 %v320, 16
        %v340 = vrot.slane %v338, 7
        %v341 = vshll.u32 %v320, 16
        %v343 = vor.u32 %v340, %v341
        %v344 = vsel %vm322, %v336, %v343
        %347 = vst [vmem:[#allocation4] sm:$0xf] %v335
        %348 = vst [vmem:[#allocation4 + $0xc] sm:$0xf] %v344
        %v349 = vld [vmem:[#allocation2 + $0x8] sm:$0xf]
        %v350 = vld [vmem:[#allocation2 + $0xc] sm:$0xf]
        %351 = vst [vmem:[#allocation4 + $0x4] sm:$0xf] %v349
        %352 = vst [vmem:[#allocation4 + $0x10] sm:$0xf] %v350
        %v353 = vld [vmem:[#allocation2 + $0x8] sm:$0xf]
        %v354 = vld [vmem:[#allocation2 + $0xc] sm:$0xf]
        %v355 = vld [vmem:[#allocation2 + $0x10] sm:$0x1]
        %vm356 = vsmask.f32 3328
        %vm357 = vsmask.f32 7440
        %vm358 = vmor %vm356, %vm357
        %v360 = vshrl.u32 %v353, 16
        %v362 = vrot.slane %v360, 4
        %v363 = vshll.u32 %v353, 16
        %v365 = vrot.slane %v363, 5
        %v366 = vor.u32 %v362, %v365
        %v367 = vrot.slane %v366, 4
        %v369 = vshll.u32 %v354, 16
        %v371 = vrot.slane %v369, 5
        %v372 = vsel %vm358, %v367, %v371
        %v373 = vshrl.u32 %v354, 16
        %v375 = vrot.slane %v373, 4
        %v376 = vor.u32 %v375, %v371
        %v377 = vrot.slane %v376, 4
        %v379 = vshll.u32 %v355, 16
        %v381 = vrot.slane %v379, 5
        %v382 = vsel %vm358, %v377, %v381
        %385 = vst [vmem:[#allocation4 + $0x8] sm:$0xf] %v372
        %386 = vst [vmem:[#allocation4 + $0x14] sm:$0xf] %v382
        %v387 = vld [vmem:[%s4] sm:$0x1]
        %v388 = vld [vmem:[#allocation4] sm:$0xff]
        %v389 = vld [vmem:[#allocation4 + $0x8] sm:$0xf]
        %v390 = vld [vmem:[#allocation4 + $0xc] sm:$0xff]
        %v391 = vld [vmem:[#allocation4 + $0x14] sm:$0xf]
        %v392 = vld [vmem:[#allocation9] sm:$0xf]
        %v393 = vld [vmem:[#allocation9 + $0x4] sm:$0xf]
        %v394 = vld [vmem:[#allocation9 + $0x8] sm:$0xf]
        %v395 = vld [vmem:[#allocation9 + $0xc] sm:$0xf]
        %v396 = vld [vmem:[#allocation9 + $0x10] sm:$0xf]
        %v397 = vld [vmem:[#allocation9 + $0x14] sm:$0xf]
        %v398 = vld [vmem:[#allocation9 + $0x18] sm:$0xf]
        %v399 = vld [vmem:[#allocation9 + $0x1c] sm:$0xf]
        %v400 = vld [vmem:[#allocation9 + $0x20] sm:$0xf]
        %v401 = vld [vmem:[#allocation9 + $0x24] sm:$0xf]
        %v402 = vld [vmem:[#allocation9 + $0x28] sm:$0xf]
        %v403 = vld [vmem:[#allocation9 + $0x2c] sm:$0xf]
        %v404 = vld [vmem:[#allocation9 + $0x30] sm:$0xf]
        %v405 = vld [vmem:[#allocation9 + $0x34] sm:$0xf]
        %v406 = vld [vmem:[#allocation9 + $0x38] sm:$0xf]
        %v407 = vld [vmem:[#allocation9 + $0x3c] sm:$0xf]
        %v408 = vld [vmem:[#allocation9 + $0x40] sm:$0xf]
        %v409 = vld [vmem:[#allocation9 + $0x44] sm:$0xf]
        %v410 = vld [vmem:[#allocation9 + $0x48] sm:$0xf]
        %v411 = vld [vmem:[#allocation9 + $0x4c] sm:$0xf]
        %v412 = vld [vmem:[#allocation9 + $0x50] sm:$0xf]
        %v413 = vld [vmem:[#allocation9 + $0x54] sm:$0xf]
        %v414 = vld [vmem:[#allocation9 + $0x58] sm:$0xf]
        %v415 = vld [vmem:[#allocation9 + $0x5c] sm:$0xf]
        %v416 = vld [vmem:[#allocation9 + $0x60] sm:$0xf]
        %v417 = vld [vmem:[#allocation9 + $0x64] sm:$0xf]
        %v418 = vld [vmem:[#allocation9 + $0x68] sm:$0xf]
        %v419 = vld [vmem:[#allocation9 + $0x6c] sm:$0xf]
        %v420 = vld [vmem:[#allocation9 + $0x70] sm:$0xf]
        %v421 = vld [vmem:[#allocation9 + $0x74] sm:$0xf]
        %v422 = vld [vmem:[#allocation9 + $0x78] sm:$0xf]
        %v423 = vld [vmem:[#allocation9 + $0x7c] sm:$0xf]
        %v424 = vld [vmem:[#allocation9 + $0x80] sm:$0xf]
        %v425 = vld [vmem:[#allocation9 + $0x84] sm:$0xf]
        %v426 = vld [vmem:[#allocation9 + $0x88] sm:$0xf]
        %v427 = vld [vmem:[#allocation9 + $0x8c] sm:$0xf]
        %v428 = vld [vmem:[#allocation9 + $0x90] sm:$0xf]
        %v429 = vld [vmem:[#allocation9 + $0x94] sm:$0xf]
        %v430 = vld [vmem:[#allocation9 + $0x98] sm:$0xf]
        %v431 = vld [vmem:[#allocation9 + $0x9c] sm:$0xf]
        %v432 = vld [vmem:[#allocation9 + $0xa0] sm:$0xf]
        %v433 = vld [vmem:[#allocation9 + $0xa4] sm:$0xf]
        %v434 = vld [vmem:[#allocation9 + $0xa8] sm:$0xf]
        %v435 = vld [vmem:[#allocation9 + $0xac] sm:$0xf]
        %v436 = vld [vmem:[#allocation9 + $0xb0] sm:$0xf]
        %v437 = vld [vmem:[#allocation9 + $0xb4] sm:$0xf]
        %v438 = vld [vmem:[#allocation9 + $0xb8] sm:$0xf]
        %v439 = vld [vmem:[#allocation9 + $0xbc] sm:$0xf]
        %v440 = vlaneseq
        %v441 = vshrl.u32 %v440, 7
        %v442 = vsub.s32 0, %v441
        %v443 = vrot.slane %v387, %v442
        %v448 = vunpack.c.l.b16 %v388
        %v449 = vunpack.c.h.b16 %v388
        %v450 = vunpack.c.l.b16 %v389
        %v451 = vunpack.c.l.b16 %v390
        %v452 = vunpack.c.h.b16 %v390
        %v453 = vunpack.c.l.b16 %v391
        %v454 = vpack.c.b16 %v451, %v448
        %v455 = vpack.c.b16 %v452, %v449
        %v456 = vpack.c.b16 %v453, %v450
        %v508 = vunpack.c.l.b16 %v392
        %v509 = vunpack.c.l.b16 %v393
        %v510 = vunpack.c.l.b16 %v394
        %v511 = vunpack.c.l.b16 %v395
        %v512 = vunpack.c.l.b16 %v396
        %v513 = vunpack.c.l.b16 %v397
        %v514 = vunpack.c.l.b16 %v398
        %v515 = vunpack.c.l.b16 %v399
        %v516 = vunpack.c.l.b16 %v400
        %v517 = vunpack.c.l.b16 %v401
        %v518 = vunpack.c.l.b16 %v402
        %v519 = vunpack.c.l.b16 %v403
        %v520 = vunpack.c.l.b16 %v404
        %v521 = vunpack.c.l.b16 %v405
        %v522 = vunpack.c.l.b16 %v406
        %v523 = vunpack.c.l.b16 %v407
        %v524 = vunpack.c.l.b16 %v408
        %v525 = vunpack.c.l.b16 %v409
        %v526 = vunpack.c.l.b16 %v410
        %v527 = vunpack.c.l.b16 %v411
        %v528 = vunpack.c.l.b16 %v412
        %v529 = vunpack.c.l.b16 %v413
        %v530 = vunpack.c.l.b16 %v414
        %v531 = vunpack.c.l.b16 %v415
        %v532 = vunpack.c.l.b16 %v416
        %v533 = vunpack.c.l.b16 %v417
        %v534 = vunpack.c.l.b16 %v418
        %v535 = vunpack.c.l.b16 %v419
        %v536 = vunpack.c.l.b16 %v420
        %v537 = vunpack.c.l.b16 %v421
        %v538 = vunpack.c.l.b16 %v422
        %v539 = vunpack.c.l.b16 %v423
        %v540 = vunpack.c.l.b16 %v424
        %v541 = vunpack.c.l.b16 %v425
        %v542 = vunpack.c.l.b16 %v426
        %v543 = vunpack.c.l.b16 %v427
        %v544 = vunpack.c.l.b16 %v428
        %v545 = vunpack.c.l.b16 %v429
        %v546 = vunpack.c.l.b16 %v430
        %v547 = vunpack.c.l.b16 %v431
        %v548 = vunpack.c.l.b16 %v432
        %v549 = vunpack.c.l.b16 %v433
        %v550 = vunpack.c.l.b16 %v434
        %v551 = vunpack.c.l.b16 %v435
        %v552 = vunpack.c.l.b16 %v436
        %v553 = vunpack.c.l.b16 %v437
        %v554 = vunpack.c.l.b16 %v438
        %v555 = vunpack.c.l.b16 %v439
        %v556 = vpack.c.b16 %v509, %v508
        %v557 = vpack.c.b16 %v511, %v510
        %v558 = vpack.c.b16 %v513, %v512
        %v559 = vpack.c.b16 %v515, %v514
        %v560 = vpack.c.b16 %v517, %v516
        %v561 = vpack.c.b16 %v519, %v518
        %v562 = vpack.c.b16 %v521, %v520
        %v563 = vpack.c.b16 %v523, %v522
        %v564 = vpack.c.b16 %v525, %v524
        %v565 = vpack.c.b16 %v527, %v526
        %v566 = vpack.c.b16 %v529, %v528
        %v567 = vpack.c.b16 %v531, %v530
        %v568 = vpack.c.b16 %v533, %v532
        %v569 = vpack.c.b16 %v535, %v534
        %v570 = vpack.c.b16 %v537, %v536
        %v571 = vpack.c.b16 %v539, %v538
        %v572 = vpack.c.b16 %v541, %v540
        %v573 = vpack.c.b16 %v543, %v542
        %v574 = vpack.c.b16 %v545, %v544
        %v575 = vpack.c.b16 %v547, %v546
        %v576 = vpack.c.b16 %v549, %v548
        %v577 = vpack.c.b16 %v551, %v550
        %v578 = vpack.c.b16 %v553, %v552
        %v579 = vpack.c.b16 %v555, %v554
        %604 = vmatprep.subr.bf16.mxu0 0
        %605 = vmatpush1.bf16.msra.mxu0 %v563
        %606 = vmatprep.subr.bf16.mxu0 0
        %607 = vmatpush1.bf16.msra.mxu0 %v562
        %608 = vmatprep.subr.bf16.mxu0 0
        %609 = vmatpush1.bf16.msra.mxu0 %v561
        %610 = vmatprep.subr.bf16.mxu0 0
        %611 = vmatpush1.bf16.msra.mxu0 %v560
        %612 = vmatprep.subr.bf16.mxu0 0
        %613 = vmatpush1.bf16.msra.mxu0 %v559
        %614 = vmatprep.subr.bf16.mxu0 0
        %615 = vmatpush1.bf16.msra.mxu0 %v558
        %616 = vmatprep.subr.bf16.mxu0 0
        %617 = vmatpush1.bf16.msra.mxu0 %v557
        %618 = vmatprep.subr.bf16.mxu0 0
        %619 = vmatpush1.bf16.msra.mxu0 %v556
        %620 = vmatprep.subr.bf16.mxu0 0
        %621 = vmatpush2.bf16.msra.mxu0 %v571
        %622 = vmatprep.subr.bf16.mxu0 0
        %623 = vmatpush2.bf16.msra.mxu0 %v570
        %624 = vmatprep.subr.bf16.mxu0 0
        %625 = vmatpush2.bf16.msra.mxu0 %v569
        %626 = vmatprep.subr.bf16.mxu0 0
        %627 = vmatpush2.bf16.msra.mxu0 %v568
        %628 = vmatprep.subr.bf16.mxu0 0
        %629 = vmatpush2.bf16.msra.mxu0 %v567
        %630 = vmatprep.subr.bf16.mxu0 0
        %631 = vmatpush2.bf16.msra.mxu0 %v566
        %632 = vmatprep.subr.bf16.mxu0 0
        %633 = vmatpush2.bf16.msra.mxu0 %v565
        %634 = vmatprep.subr.bf16.mxu0 0
        %635 = vmatpush2.bf16.msra.mxu0 %v564
        %636 = vmatprep.mubr.bf16.mxu0 %v455
        %637 = vmatmul.mubr.bf16.gmra.mxu0 %v454
        %v638 = vpop.f32.mrf.mxu0
        %v639 = vadd.f32 %v443, %v638
        %v640 = vpop.f32.mrf.mxu0
        %v641 = vpop.f32.mrf.mxu0
        %v642 = vadd.f32 %v443, %v641
        %v643 = vpop.f32.mrf.mxu0
        %644 = vdwg.mxu0
        %645 = vmatprep.subr.bf16.mxu0 0
        %646 = vmatpush1.bf16.msra.mxu0 %v579
        %647 = vmatprep.subr.bf16.mxu0 0
        %648 = vmatpush1.bf16.msra.mxu0 %v578
        %649 = vmatprep.subr.bf16.mxu0 0
        %650 = vmatpush1.bf16.msra.mxu0 %v577
        %651 = vmatprep.subr.bf16.mxu0 0
        %652 = vmatpush1.bf16.msra.mxu0 %v576
        %653 = vmatprep.subr.bf16.mxu0 0
        %654 = vmatpush1.bf16.msra.mxu0 %v575
        %655 = vmatprep.subr.bf16.mxu0 0
        %656 = vmatpush1.bf16.msra.mxu0 %v574
        %657 = vmatprep.subr.bf16.mxu0 0
        %658 = vmatpush1.bf16.msra.mxu0 %v573
        %659 = vmatprep.subr.bf16.mxu0 0
        %660 = vmatpush1.bf16.msra.mxu0 %v572
        %661 = vmatprep.subr.bf16.mxu0 0
        %662 = vmatpush2.bf16.msra.mxu0 0
        %663 = vmatprep.subr.bf16.mxu0 0
        %664 = vmatpush2.bf16.msra.mxu0 0
        %665 = vmatprep.subr.bf16.mxu0 0
        %666 = vmatpush2.bf16.msra.mxu0 0
        %667 = vmatprep.subr.bf16.mxu0 0
        %668 = vmatpush2.bf16.msra.mxu0 0
        %669 = vmatprep.subr.bf16.mxu0 0
        %670 = vmatpush2.bf16.msra.mxu0 0
        %671 = vmatprep.subr.bf16.mxu0 0
        %672 = vmatpush2.bf16.msra.mxu0 0
        %673 = vmatprep.subr.bf16.mxu0 0
        %674 = vmatpush2.bf16.msra.mxu0 0
        %675 = vmatprep.subr.bf16.mxu0 0
        %676 = vmatpush2.bf16.msra.mxu0 0
        %677 = vmatprep.mubr.bf16.mxu0 0
        %678 = vmatmul.mubr.bf16.gmra.mxu0 %v456
        %v679 = vpop.f32.mrf.mxu0
        %v680 = vadd.f32 %v639, %v679
        %v681 = vpop.f32.mrf.mxu0
        %v682 = vpop.f32.mrf.mxu0
        %v683 = vadd.f32 %v642, %v682
        %v684 = vpop.f32.mrf.mxu0
        %685 = vdwg.mxu0
        %v686 = vmax.f32 %v680, 0.0
        %v687 = vmax.f32 %v683, 0.0
        %v688 = vpack.c.bf16 %v687, %v686
        %v690 = vunpack.c.l.b16 %v688
        %v691 = vunpack.c.h.b16 %v688
        %v692 = vpack.c.b16 %v690, %v690
        %v693 = vpack.c.b16 %v691, %v691
        %696 = vst [vmem:[#allocation3 + $0x8] sm:$0xf] %v692
        %697 = vst [vmem:[#allocation3 + $0xc] sm:$0xf] %v693
        %v698 = vld [vmem:[#allocation3 + $0x4] sm:$0x8]
        %v699 = vld [vmem:[#allocation3 + $0x8] sm:$0xf]
        %v700 = vld [vmem:[#allocation3 + $0xc] sm:$0xf]
        %v702 = vshrl.u32 %v698, 16
        %v704 = vrot.slane %v702, 7
        %v705 = vrot.slane %v704, 4
        %v707 = vshrl.u32 %v699, 16
        %v709 = vrot.slane %v707, 7
        %v710 = vshll.u32 %v699, 16
        %v712 = vor.u32 %v709, %v710
        %v713 = vsel %vm322, %v705, %v712
        %v714 = vrot.slane %v709, 4
        %v716 = vshrl.u32 %v700, 16
        %v718 = vrot.slane %v716, 7
        %v719 = vshll.u32 %v700, 16
        %v721 = vor.u32 %v718, %v719
        %v722 = vsel %vm322, %v714, %v721
        %725 = vst [vmem:[#allocation5] sm:$0xf] %v713
        %726 = vst [vmem:[#allocation5 + $0xc] sm:$0xf] %v722
        %v727 = vld [vmem:[#allocation3 + $0x8] sm:$0xf]
        %v728 = vld [vmem:[#allocation3 + $0xc] sm:$0xf]
        %729 = vst [vmem:[#allocation5 + $0x4] sm:$0xf] %v727
        %730 = vst [vmem:[#allocation5 + $0x10] sm:$0xf] %v728
        %v731 = vld [vmem:[#allocation3 + $0x8] sm:$0xf]
        %v732 = vld [vmem:[#allocation3 + $0xc] sm:$0xf]
        %v733 = vld [vmem:[#allocation3 + $0x10] sm:$0x1]
        %v735 = vshrl.u32 %v731, 16
        %v737 = vrot.slane %v735, 4
        %v738 = vshll.u32 %v731, 16
        %v740 = vrot.slane %v738, 5
        %v741 = vor.u32 %v737, %v740
        %v742 = vrot.slane %v741, 4
        %v744 = vshll.u32 %v732, 16
        %v746 = vrot.slane %v744, 5
        %v747 = vsel %vm358, %v742, %v746
        %v748 = vshrl.u32 %v732, 16
        %v750 = vrot.slane %v748, 4
        %v751 = vor.u32 %v750, %v746
        %v752 = vrot.slane %v751, 4
        %v754 = vshll.u32 %v733, 16
        %v756 = vrot.slane %v754, 5
        %v757 = vsel %vm358, %v752, %v756
        %760 = vst [vmem:[#allocation5 + $0x8] sm:$0xf] %v747
        %761 = vst [vmem:[#allocation5 + $0x14] sm:$0xf] %v757
        %v762 = vld [vmem:[%s4 + $0x1] sm:$0x1]
        %v763 = vld [vmem:[#allocation5] sm:$0xff]
        %v764 = vld [vmem:[#allocation5 + $0x8] sm:$0xf]
        %v765 = vld [vmem:[#allocation5 + $0xc] sm:$0xff]
        %v766 = vld [vmem:[#allocation5 + $0x14] sm:$0xf]
        %v767 = vld [vmem:[#allocation11] sm:$0xf]
        %v768 = vld [vmem:[#allocation11 + $0x4] sm:$0xf]
        %v769 = vld [vmem:[#allocation11 + $0x8] sm:$0xf]
        %v770 = vld [vmem:[#allocation11 + $0xc] sm:$0xf]
        %v771 = vld [vmem:[#allocation11 + $0x10] sm:$0xf]
        %v772 = vld [vmem:[#allocation11 + $0x14] sm:$0xf]
        %v773 = vld [vmem:[#allocation11 + $0x18] sm:$0xf]
        %v774 = vld [vmem:[#allocation11 + $0x1c] sm:$0xf]
        %v775 = vld [vmem:[#allocation11 + $0x20] sm:$0xf]
        %v776 = vld [vmem:[#allocation11 + $0x24] sm:$0xf]
        %v777 = vld [vmem:[#allocation11 + $0x28] sm:$0xf]
        %v778 = vld [vmem:[#allocation11 + $0x2c] sm:$0xf]
        %v779 = vld [vmem:[#allocation11 + $0x30] sm:$0xf]
        %v780 = vld [vmem:[#allocation11 + $0x34] sm:$0xf]
        %v781 = vld [vmem:[#allocation11 + $0x38] sm:$0xf]
        %v782 = vld [vmem:[#allocation11 + $0x3c] sm:$0xf]
        %v783 = vld [vmem:[#allocation11 + $0x40] sm:$0xf]
        %v784 = vld [vmem:[#allocation11 + $0x44] sm:$0xf]
        %v785 = vld [vmem:[#allocation11 + $0x48] sm:$0xf]
        %v786 = vld [vmem:[#allocation11 + $0x4c] sm:$0xf]
        %v787 = vld [vmem:[#allocation11 + $0x50] sm:$0xf]
        %v788 = vld [vmem:[#allocation11 + $0x54] sm:$0xf]
        %v789 = vld [vmem:[#allocation11 + $0x58] sm:$0xf]
        %v790 = vld [vmem:[#allocation11 + $0x5c] sm:$0xf]
        %v791 = vld [vmem:[#allocation11 + $0x60] sm:$0xf]
        %v792 = vld [vmem:[#allocation11 + $0x64] sm:$0xf]
        %v793 = vld [vmem:[#allocation11 + $0x68] sm:$0xf]
        %v794 = vld [vmem:[#allocation11 + $0x6c] sm:$0xf]
        %v795 = vld [vmem:[#allocation11 + $0x70] sm:$0xf]
        %v796 = vld [vmem:[#allocation11 + $0x74] sm:$0xf]
        %v797 = vld [vmem:[#allocation11 + $0x78] sm:$0xf]
        %v798 = vld [vmem:[#allocation11 + $0x7c] sm:$0xf]
        %v799 = vld [vmem:[#allocation11 + $0x80] sm:$0xf]
        %v800 = vld [vmem:[#allocation11 + $0x84] sm:$0xf]
        %v801 = vld [vmem:[#allocation11 + $0x88] sm:$0xf]
        %v802 = vld [vmem:[#allocation11 + $0x8c] sm:$0xf]
        %v803 = vld [vmem:[#allocation11 + $0x90] sm:$0xf]
        %v804 = vld [vmem:[#allocation11 + $0x94] sm:$0xf]
        %v805 = vld [vmem:[#allocation11 + $0x98] sm:$0xf]
        %v806 = vld [vmem:[#allocation11 + $0x9c] sm:$0xf]
        %v807 = vld [vmem:[#allocation11 + $0xa0] sm:$0xf]
        %v808 = vld [vmem:[#allocation11 + $0xa4] sm:$0xf]
        %v809 = vld [vmem:[#allocation11 + $0xa8] sm:$0xf]
        %v810 = vld [vmem:[#allocation11 + $0xac] sm:$0xf]
        %v811 = vld [vmem:[#allocation11 + $0xb0] sm:$0xf]
        %v812 = vld [vmem:[#allocation11 + $0xb4] sm:$0xf]
        %v813 = vld [vmem:[#allocation11 + $0xb8] sm:$0xf]
        %v814 = vld [vmem:[#allocation11 + $0xbc] sm:$0xf]
        %v815 = vlaneseq
        %v816 = vshrl.u32 %v815, 7
        %v817 = vsub.s32 0, %v816
        %v818 = vrot.slane %v762, %v817
        %v823 = vunpack.c.l.b16 %v763
        %v824 = vunpack.c.h.b16 %v763
        %v825 = vunpack.c.l.b16 %v764
        %v826 = vunpack.c.l.b16 %v765
        %v827 = vunpack.c.h.b16 %v765
        %v828 = vunpack.c.l.b16 %v766
        %v829 = vpack.c.b16 %v826, %v823
        %v830 = vpack.c.b16 %v827, %v824
        %v831 = vpack.c.b16 %v828, %v825
        %v883 = vunpack.c.l.b16 %v767
        %v884 = vunpack.c.l.b16 %v768
        %v885 = vunpack.c.l.b16 %v769
        %v886 = vunpack.c.l.b16 %v770
        %v887 = vunpack.c.l.b16 %v771
        %v888 = vunpack.c.l.b16 %v772
        %v889 = vunpack.c.l.b16 %v773
        %v890 = vunpack.c.l.b16 %v774
        %v891 = vunpack.c.l.b16 %v775
        %v892 = vunpack.c.l.b16 %v776
        %v893 = vunpack.c.l.b16 %v777
        %v894 = vunpack.c.l.b16 %v778
        %v895 = vunpack.c.l.b16 %v779
        %v896 = vunpack.c.l.b16 %v780
        %v897 = vunpack.c.l.b16 %v781
        %v898 = vunpack.c.l.b16 %v782
        %v899 = vunpack.c.l.b16 %v783
        %v900 = vunpack.c.l.b16 %v784
        %v901 = vunpack.c.l.b16 %v785
        %v902 = vunpack.c.l.b16 %v786
        %v903 = vunpack.c.l.b16 %v787
        %v904 = vunpack.c.l.b16 %v788
        %v905 = vunpack.c.l.b16 %v789
        %v906 = vunpack.c.l.b16 %v790
        %v907 = vunpack.c.l.b16 %v791
        %v908 = vunpack.c.l.b16 %v792
        %v909 = vunpack.c.l.b16 %v793
        %v910 = vunpack.c.l.b16 %v794
        %v911 = vunpack.c.l.b16 %v795
        %v912 = vunpack.c.l.b16 %v796
        %v913 = vunpack.c.l.b16 %v797
        %v914 = vunpack.c.l.b16 %v798
        %v915 = vunpack.c.l.b16 %v799
        %v916 = vunpack.c.l.b16 %v800
        %v917 = vunpack.c.l.b16 %v801
        %v918 = vunpack.c.l.b16 %v802
        %v919 = vunpack.c.l.b16 %v803
        %v920 = vunpack.c.l.b16 %v804
        %v921 = vunpack.c.l.b16 %v805
        %v922 = vunpack.c.l.b16 %v806
        %v923 = vunpack.c.l.b16 %v807
        %v924 = vunpack.c.l.b16 %v808
        %v925 = vunpack.c.l.b16 %v809
        %v926 = vunpack.c.l.b16 %v810
        %v927 = vunpack.c.l.b16 %v811
        %v928 = vunpack.c.l.b16 %v812
        %v929 = vunpack.c.l.b16 %v813
        %v930 = vunpack.c.l.b16 %v814
        %v931 = vpack.c.b16 %v884, %v883
        %v932 = vpack.c.b16 %v886, %v885
        %v933 = vpack.c.b16 %v888, %v887
        %v934 = vpack.c.b16 %v890, %v889
        %v935 = vpack.c.b16 %v892, %v891
        %v936 = vpack.c.b16 %v894, %v893
        %v937 = vpack.c.b16 %v896, %v895
        %v938 = vpack.c.b16 %v898, %v897
        %v939 = vpack.c.b16 %v900, %v899
        %v940 = vpack.c.b16 %v902, %v901
        %v941 = vpack.c.b16 %v904, %v903
        %v942 = vpack.c.b16 %v906, %v905
        %v943 = vpack.c.b16 %v908, %v907
        %v944 = vpack.c.b16 %v910, %v909
        %v945 = vpack.c.b16 %v912, %v911
        %v946 = vpack.c.b16 %v914, %v913
        %v947 = vpack.c.b16 %v916, %v915
        %v948 = vpack.c.b16 %v918, %v917
        %v949 = vpack.c.b16 %v920, %v919
        %v950 = vpack.c.b16 %v922, %v921
        %v951 = vpack.c.b16 %v924, %v923
        %v952 = vpack.c.b16 %v926, %v925
        %v953 = vpack.c.b16 %v928, %v927
        %v954 = vpack.c.b16 %v930, %v929
        %979 = vmatprep.subr.bf16.mxu0 0
        %980 = vmatpush1.bf16.msra.mxu0 %v938
        %981 = vmatprep.subr.bf16.mxu0 0
        %982 = vmatpush1.bf16.msra.mxu0 %v937
        %983 = vmatprep.subr.bf16.mxu0 0
        %984 = vmatpush1.bf16.msra.mxu0 %v936
        %985 = vmatprep.subr.bf16.mxu0 0
        %986 = vmatpush1.bf16.msra.mxu0 %v935
        %987 = vmatprep.subr.bf16.mxu0 0
        %988 = vmatpush1.bf16.msra.mxu0 %v934
        %989 = vmatprep.subr.bf16.mxu0 0
        %990 = vmatpush1.bf16.msra.mxu0 %v933
        %991 = vmatprep.subr.bf16.mxu0 0
        %992 = vmatpush1.bf16.msra.mxu0 %v932
        %993 = vmatprep.subr.bf16.mxu0 0
        %994 = vmatpush1.bf16.msra.mxu0 %v931
        %995 = vmatprep.subr.bf16.mxu0 0
        %996 = vmatpush2.bf16.msra.mxu0 %v946
        %997 = vmatprep.subr.bf16.mxu0 0
        %998 = vmatpush2.bf16.msra.mxu0 %v945
        %999 = vmatprep.subr.bf16.mxu0 0
        %1000 = vmatpush2.bf16.msra.mxu0 %v944
        %1001 = vmatprep.subr.bf16.mxu0 0
        %1002 = vmatpush2.bf16.msra.mxu0 %v943
        %1003 = vmatprep.subr.bf16.mxu0 0
        %1004 = vmatpush2.bf16.msra.mxu0 %v942
        %1005 = vmatprep.subr.bf16.mxu0 0
        %1006 = vmatpush2.bf16.msra.mxu0 %v941
        %1007 = vmatprep.subr.bf16.mxu0 0
        %1008 = vmatpush2.bf16.msra.mxu0 %v940
        %1009 = vmatprep.subr.bf16.mxu0 0
        %1010 = vmatpush2.bf16.msra.mxu0 %v939
        %1011 = vmatprep.mubr.bf16.mxu0 %v830
        %1012 = vmatmul.mubr.bf16.gmra.mxu0 %v829
        %v1013 = vpop.f32.mrf.mxu0
        %v1014 = vadd.f32 %v818, %v1013
        %v1015 = vpop.f32.mrf.mxu0
        %v1016 = vpop.f32.mrf.mxu0
        %v1017 = vadd.f32 %v818, %v1016
        %v1018 = vpop.f32.mrf.mxu0
        %1019 = vdwg.mxu0
        %1020 = vmatprep.subr.bf16.mxu0 0
        %1021 = vmatpush1.bf16.msra.mxu0 %v954
        %1022 = vmatprep.subr.bf16.mxu0 0
        %1023 = vmatpush1.bf16.msra.mxu0 %v953
        %1024 = vmatprep.subr.bf16.mxu0 0
        %1025 = vmatpush1.bf16.msra.mxu0 %v952
        %1026 = vmatprep.subr.bf16.mxu0 0
        %1027 = vmatpush1.bf16.msra.mxu0 %v951
        %1028 = vmatprep.subr.bf16.mxu0 0
        %1029 = vmatpush1.bf16.msra.mxu0 %v950
        %1030 = vmatprep.subr.bf16.mxu0 0
        %1031 = vmatpush1.bf16.msra.mxu0 %v949
        %1032 = vmatprep.subr.bf16.mxu0 0
        %1033 = vmatpush1.bf16.msra.mxu0 %v948
        %1034 = vmatprep.subr.bf16.mxu0 0
        %1035 = vmatpush1.bf16.msra.mxu0 %v947
        %1036 = vmatprep.subr.bf16.mxu0 0
        %1037 = vmatpush2.bf16.msra.mxu0 0
        %1038 = vmatprep.subr.bf16.mxu0 0
        %1039 = vmatpush2.bf16.msra.mxu0 0
        %1040 = vmatprep.subr.bf16.mxu0 0
        %1041 = vmatpush2.bf16.msra.mxu0 0
        %1042 = vmatprep.subr.bf16.mxu0 0
        %1043 = vmatpush2.bf16.msra.mxu0 0
        %1044 = vmatprep.subr.bf16.mxu0 0
        %1045 = vmatpush2.bf16.msra.mxu0 0
        %1046 = vmatprep.subr.bf16.mxu0 0
        %1047 = vmatpush2.bf16.msra.mxu0 0
        %1048 = vmatprep.subr.bf16.mxu0 0
        %1049 = vmatpush2.bf16.msra.mxu0 0
        %1050 = vmatprep.subr.bf16.mxu0 0
        %1051 = vmatpush2.bf16.msra.mxu0 0
        %1052 = vmatprep.mubr.bf16.mxu0 0
        %1053 = vmatmul.mubr.bf16.gmra.mxu0 %v831
        %v1054 = vpop.f32.mrf.mxu0
        %v1055 = vadd.f32 %v1014, %v1054
        %v1056 = vpop.f32.mrf.mxu0
        %v1057 = vpop.f32.mrf.mxu0
        %v1058 = vadd.f32 %v1017, %v1057
        %v1059 = vpop.f32.mrf.mxu0
        %1060 = vdwg.mxu0
        %v1061 = vmax.f32 %v1055, 0.0
        %v1062 = vmax.f32 %v1058, 0.0
        %v1063 = vpack.c.bf16 %v1062, %v1061
        %v1065 = vunpack.c.l.b16 %v1063
        %v1066 = vunpack.c.h.b16 %v1063
        %v1067 = vpack.c.b16 %v1065, %v1065
        %v1068 = vpack.c.b16 %v1066, %v1066
        %1071 = vst [vmem:[#allocation3 + $0x8] sm:$0xf] %v1067
        %1072 = vst [vmem:[#allocation3 + $0xc] sm:$0xf] %v1068
        %v1073 = vld [vmem:[#allocation3 + $0x4] sm:$0x8]
        %v1074 = vld [vmem:[#allocation3 + $0x8] sm:$0xf]
        %v1075 = vld [vmem:[#allocation3 + $0xc] sm:$0xf]
        %v1077 = vshrl.u32 %v1073, 16
        %v1079 = vrot.slane %v1077, 7
        %v1080 = vrot.slane %v1079, 4
        %v1082 = vshrl.u32 %v1074, 16
        %v1084 = vrot.slane %v1082, 7
        %v1085 = vshll.u32 %v1074, 16
        %v1087 = vor.u32 %v1084, %v1085
        %v1088 = vsel %vm322, %v1080, %v1087
        %v1089 = vrot.slane %v1084, 4
        %v1091 = vshrl.u32 %v1075, 16
        %v1093 = vrot.slane %v1091, 7
        %v1094 = vshll.u32 %v1075, 16
        %v1096 = vor.u32 %v1093, %v1094
        %v1097 = vsel %vm322, %v1089, %v1096
        %1100 = vst [vmem:[#allocation5] sm:$0xf] %v1088
        %1101 = vst [vmem:[#allocation5 + $0xc] sm:$0xf] %v1097
        %v1102 = vld [vmem:[#allocation3 + $0x8] sm:$0xf]
        %v1103 = vld [vmem:[#allocation3 + $0xc] sm:$0xf]
        %1104 = vst [vmem:[#allocation5 + $0x4] sm:$0xf] %v1102
        %1105 = vst [vmem:[#allocation5 + $0x10] sm:$0xf] %v1103
        %v1106 = vld [vmem:[#allocation3 + $0x8] sm:$0xf]
        %v1107 = vld [vmem:[#allocation3 + $0xc] sm:$0xf]
        %v1108 = vld [vmem:[#allocation3 + $0x10] sm:$0x1]
        %v1110 = vshrl.u32 %v1106, 16
        %v1112 = vrot.slane %v1110, 4
        %v1113 = vshll.u32 %v1106, 16
        %v1115 = vrot.slane %v1113, 5
        %v1116 = vor.u32 %v1112, %v1115
        %v1117 = vrot.slane %v1116, 4
        %v1119 = vshll.u32 %v1107, 16
        %v1121 = vrot.slane %v1119, 5
        %v1122 = vsel %vm358, %v1117, %v1121
        %v1123 = vshrl.u32 %v1107, 16
        %v1125 = vrot.slane %v1123, 4
        %v1126 = vor.u32 %v1125, %v1121
        %v1127 = vrot.slane %v1126, 4
        %v1129 = vshll.u32 %v1108, 16
        %v1131 = vrot.slane %v1129, 5
        %v1132 = vsel %vm358, %v1127, %v1131
        %1135 = vst [vmem:[#allocation5 + $0x8] sm:$0xf] %v1122
        %1136 = vst [vmem:[#allocation5 + $0x14] sm:$0xf] %v1132
        %v1137 = vld [vmem:[%s4 + $0x2] sm:$0x1]
        %v1138 = vld [vmem:[#allocation5] sm:$0xff]
        %v1139 = vld [vmem:[#allocation5 + $0x8] sm:$0xf]
        %v1140 = vld [vmem:[#allocation5 + $0xc] sm:$0xff]
        %v1141 = vld [vmem:[#allocation5 + $0x14] sm:$0xf]
        %v1142 = vld [vmem:[#allocation12] sm:$0xf]
        %v1143 = vld [vmem:[#allocation12 + $0x4] sm:$0xf]
        %v1144 = vld [vmem:[#allocation12 + $0x8] sm:$0xf]
        %v1145 = vld [vmem:[#allocation12 + $0xc] sm:$0xf]
        %v1146 = vld [vmem:[#allocation12 + $0x10] sm:$0xf]
        %v1147 = vld [vmem:[#allocation12 + $0x14] sm:$0xf]
        %v1148 = vld [vmem:[#allocation12 + $0x18] sm:$0xf]
        %v1149 = vld [vmem:[#allocation12 + $0x1c] sm:$0xf]
        %v1150 = vld [vmem:[#allocation12 + $0x20] sm:$0xf]
        %v1151 = vld [vmem:[#allocation12 + $0x24] sm:$0xf]
        %v1152 = vld [vmem:[#allocation12 + $0x28] sm:$0xf]
        %v1153 = vld [vmem:[#allocation12 + $0x2c] sm:$0xf]
        %v1154 = vld [vmem:[#allocation12 + $0x30] sm:$0xf]
        %v1155 = vld [vmem:[#allocation12 + $0x34] sm:$0xf]
        %v1156 = vld [vmem:[#allocation12 + $0x38] sm:$0xf]
        %v1157 = vld [vmem:[#allocation12 + $0x3c] sm:$0xf]
        %v1158 = vld [vmem:[#allocation12 + $0x40] sm:$0xf]
        %v1159 = vld [vmem:[#allocation12 + $0x44] sm:$0xf]
        %v1160 = vld [vmem:[#allocation12 + $0x48] sm:$0xf]
        %v1161 = vld [vmem:[#allocation12 + $0x4c] sm:$0xf]
        %v1162 = vld [vmem:[#allocation12 + $0x50] sm:$0xf]
        %v1163 = vld [vmem:[#allocation12 + $0x54] sm:$0xf]
        %v1164 = vld [vmem:[#allocation12 + $0x58] sm:$0xf]
        %v1165 = vld [vmem:[#allocation12 + $0x5c] sm:$0xf]
        %v1166 = vld [vmem:[#allocation12 + $0x60] sm:$0xf]
        %v1167 = vld [vmem:[#allocation12 + $0x64] sm:$0xf]
        %v1168 = vld [vmem:[#allocation12 + $0x68] sm:$0xf]
        %v1169 = vld [vmem:[#allocation12 + $0x6c] sm:$0xf]
        %v1170 = vld [vmem:[#allocation12 + $0x70] sm:$0xf]
        %v1171 = vld [vmem:[#allocation12 + $0x74] sm:$0xf]
        %v1172 = vld [vmem:[#allocation12 + $0x78] sm:$0xf]
        %v1173 = vld [vmem:[#allocation12 + $0x7c] sm:$0xf]
        %v1174 = vld [vmem:[#allocation12 + $0x80] sm:$0xf]
        %v1175 = vld [vmem:[#allocation12 + $0x84] sm:$0xf]
        %v1176 = vld [vmem:[#allocation12 + $0x88] sm:$0xf]
        %v1177 = vld [vmem:[#allocation12 + $0x8c] sm:$0xf]
        %v1178 = vld [vmem:[#allocation12 + $0x90] sm:$0xf]
        %v1179 = vld [vmem:[#allocation12 + $0x94] sm:$0xf]
        %v1180 = vld [vmem:[#allocation12 + $0x98] sm:$0xf]
        %v1181 = vld [vmem:[#allocation12 + $0x9c] sm:$0xf]
        %v1182 = vld [vmem:[#allocation12 + $0xa0] sm:$0xf]
        %v1183 = vld [vmem:[#allocation12 + $0xa4] sm:$0xf]
        %v1184 = vld [vmem:[#allocation12 + $0xa8] sm:$0xf]
        %v1185 = vld [vmem:[#allocation12 + $0xac] sm:$0xf]
        %v1186 = vld [vmem:[#allocation12 + $0xb0] sm:$0xf]
        %v1187 = vld [vmem:[#allocation12 + $0xb4] sm:$0xf]
        %v1188 = vld [vmem:[#allocation12 + $0xb8] sm:$0xf]
        %v1189 = vld [vmem:[#allocation12 + $0xbc] sm:$0xf]
        %v1190 = vlaneseq
        %v1191 = vshrl.u32 %v1190, 7
        %v1192 = vsub.s32 0, %v1191
        %v1193 = vrot.slane %v1137, %v1192
        %v1198 = vunpack.c.l.b16 %v1138
        %v1199 = vunpack.c.h.b16 %v1138
        %v1200 = vunpack.c.l.b16 %v1139
        %v1201 = vunpack.c.l.b16 %v1140
        %v1202 = vunpack.c.h.b16 %v1140
        %v1203 = vunpack.c.l.b16 %v1141
        %v1204 = vpack.c.b16 %v1201, %v1198
        %v1205 = vpack.c.b16 %v1202, %v1199
        %v1206 = vpack.c.b16 %v1203, %v1200
        %v1258 = vunpack.c.l.b16 %v1142
        %v1259 = vunpack.c.l.b16 %v1143
        %v1260 = vunpack.c.l.b16 %v1144
        %v1261 = vunpack.c.l.b16 %v1145
        %v1262 = vunpack.c.l.b16 %v1146
        %v1263 = vunpack.c.l.b16 %v1147
        %v1264 = vunpack.c.l.b16 %v1148
        %v1265 = vunpack.c.l.b16 %v1149
        %v1266 = vunpack.c.l.b16 %v1150
        %v1267 = vunpack.c.l.b16 %v1151
        %v1268 = vunpack.c.l.b16 %v1152
        %v1269 = vunpack.c.l.b16 %v1153
        %v1270 = vunpack.c.l.b16 %v1154
        %v1271 = vunpack.c.l.b16 %v1155
        %v1272 = vunpack.c.l.b16 %v1156
        %v1273 = vunpack.c.l.b16 %v1157
        %v1274 = vunpack.c.l.b16 %v1158
        %v1275 = vunpack.c.l.b16 %v1159
        %v1276 = vunpack.c.l.b16 %v1160
        %v1277 = vunpack.c.l.b16 %v1161
        %v1278 = vunpack.c.l.b16 %v1162
        %v1279 = vunpack.c.l.b16 %v1163
        %v1280 = vunpack.c.l.b16 %v1164
        %v1281 = vunpack.c.l.b16 %v1165
        %v1282 = vunpack.c.l.b16 %v1166
        %v1283 = vunpack.c.l.b16 %v1167
        %v1284 = vunpack.c.l.b16 %v1168
        %v1285 = vunpack.c.l.b16 %v1169
        %v1286 = vunpack.c.l.b16 %v1170
        %v1287 = vunpack.c.l.b16 %v1171
        %v1288 = vunpack.c.l.b16 %v1172
        %v1289 = vunpack.c.l.b16 %v1173
        %v1290 = vunpack.c.l.b16 %v1174
        %v1291 = vunpack.c.l.b16 %v1175
        %v1292 = vunpack.c.l.b16 %v1176
        %v1293 = vunpack.c.l.b16 %v1177
        %v1294 = vunpack.c.l.b16 %v1178
        %v1295 = vunpack.c.l.b16 %v1179
        %v1296 = vunpack.c.l.b16 %v1180
        %v1297 = vunpack.c.l.b16 %v1181
        %v1298 = vunpack.c.l.b16 %v1182
        %v1299 = vunpack.c.l.b16 %v1183
        %v1300 = vunpack.c.l.b16 %v1184
        %v1301 = vunpack.c.l.b16 %v1185
        %v1302 = vunpack.c.l.b16 %v1186
        %v1303 = vunpack.c.l.b16 %v1187
        %v1304 = vunpack.c.l.b16 %v1188
        %v1305 = vunpack.c.l.b16 %v1189
        %v1306 = vpack.c.b16 %v1259, %v1258
        %v1307 = vpack.c.b16 %v1261, %v1260
        %v1308 = vpack.c.b16 %v1263, %v1262
        %v1309 = vpack.c.b16 %v1265, %v1264
        %v1310 = vpack.c.b16 %v1267, %v1266
        %v1311 = vpack.c.b16 %v1269, %v1268
        %v1312 = vpack.c.b16 %v1271, %v1270
        %v1313 = vpack.c.b16 %v1273, %v1272
        %v1314 = vpack.c.b16 %v1275, %v1274
        %v1315 = vpack.c.b16 %v1277, %v1276
        %v1316 = vpack.c.b16 %v1279, %v1278
        %v1317 = vpack.c.b16 %v1281, %v1280
        %v1318 = vpack.c.b16 %v1283, %v1282
        %v1319 = vpack.c.b16 %v1285, %v1284
        %v1320 = vpack.c.b16 %v1287, %v1286
        %v1321 = vpack.c.b16 %v1289, %v1288
        %v1322 = vpack.c.b16 %v1291, %v1290
        %v1323 = vpack.c.b16 %v1293, %v1292
        %v1324 = vpack.c.b16 %v1295, %v1294
        %v1325 = vpack.c.b16 %v1297, %v1296
        %v1326 = vpack.c.b16 %v1299, %v1298
        %v1327 = vpack.c.b16 %v1301, %v1300
        %v1328 = vpack.c.b16 %v1303, %v1302
        %v1329 = vpack.c.b16 %v1305, %v1304
        %1354 = vmatprep.subr.bf16.mxu0 0
        %1355 = vmatpush1.bf16.msra.mxu0 %v1313
        %1356 = vmatprep.subr.bf16.mxu0 0
        %1357 = vmatpush1.bf16.msra.mxu0 %v1312
        %1358 = vmatprep.subr.bf16.mxu0 0
        %1359 = vmatpush1.bf16.msra.mxu0 %v1311
        %1360 = vmatprep.subr.bf16.mxu0 0
        %1361 = vmatpush1.bf16.msra.mxu0 %v1310
        %1362 = vmatprep.subr.bf16.mxu0 0
        %1363 = vmatpush1.bf16.msra.mxu0 %v1309
        %1364 = vmatprep.subr.bf16.mxu0 0
        %1365 = vmatpush1.bf16.msra.mxu0 %v1308
        %1366 = vmatprep.subr.bf16.mxu0 0
        %1367 = vmatpush1.bf16.msra.mxu0 %v1307
        %1368 = vmatprep.subr.bf16.mxu0 0
        %1369 = vmatpush1.bf16.msra.mxu0 %v1306
        %1370 = vmatprep.subr.bf16.mxu0 0
        %1371 = vmatpush2.bf16.msra.mxu0 %v1321
        %1372 = vmatprep.subr.bf16.mxu0 0
        %1373 = vmatpush2.bf16.msra.mxu0 %v1320
        %1374 = vmatprep.subr.bf16.mxu0 0
        %1375 = vmatpush2.bf16.msra.mxu0 %v1319
        %1376 = vmatprep.subr.bf16.mxu0 0
        %1377 = vmatpush2.bf16.msra.mxu0 %v1318
        %1378 = vmatprep.subr.bf16.mxu0 0
        %1379 = vmatpush2.bf16.msra.mxu0 %v1317
        %1380 = vmatprep.subr.bf16.mxu0 0
        %1381 = vmatpush2.bf16.msra.mxu0 %v1316
        %1382 = vmatprep.subr.bf16.mxu0 0
        %1383 = vmatpush2.bf16.msra.mxu0 %v1315
        %1384 = vmatprep.subr.bf16.mxu0 0
        %1385 = vmatpush2.bf16.msra.mxu0 %v1314
        %1386 = vmatprep.mubr.bf16.mxu0 %v1205
        %1387 = vmatmul.mubr.bf16.gmra.mxu0 %v1204
        %v1388 = vpop.f32.mrf.mxu0
        %v1389 = vadd.f32 %v1193, %v1388
        %v1390 = vpop.f32.mrf.mxu0
        %v1391 = vpop.f32.mrf.mxu0
        %v1392 = vadd.f32 %v1193, %v1391
        %v1393 = vpop.f32.mrf.mxu0
        %1394 = vdwg.mxu0
        %1395 = vmatprep.subr.bf16.mxu0 0
        %1396 = vmatpush1.bf16.msra.mxu0 %v1329
        %1397 = vmatprep.subr.bf16.mxu0 0
        %1398 = vmatpush1.bf16.msra.mxu0 %v1328
        %1399 = vmatprep.subr.bf16.mxu0 0
        %1400 = vmatpush1.bf16.msra.mxu0 %v1327
        %1401 = vmatprep.subr.bf16.mxu0 0
        %1402 = vmatpush1.bf16.msra.mxu0 %v1326
        %1403 = vmatprep.subr.bf16.mxu0 0
        %1404 = vmatpush1.bf16.msra.mxu0 %v1325
        %1405 = vmatprep.subr.bf16.mxu0 0
        %1406 = vmatpush1.bf16.msra.mxu0 %v1324
        %1407 = vmatprep.subr.bf16.mxu0 0
        %1408 = vmatpush1.bf16.msra.mxu0 %v1323
        %1409 = vmatprep.subr.bf16.mxu0 0
        %1410 = vmatpush1.bf16.msra.mxu0 %v1322
        %1411 = vmatprep.subr.bf16.mxu0 0
        %1412 = vmatpush2.bf16.msra.mxu0 0
        %1413 = vmatprep.subr.bf16.mxu0 0
        %1414 = vmatpush2.bf16.msra.mxu0 0
        %1415 = vmatprep.subr.bf16.mxu0 0
        %1416 = vmatpush2.bf16.msra.mxu0 0
        %1417 = vmatprep.subr.bf16.mxu0 0
        %1418 = vmatpush2.bf16.msra.mxu0 0
        %1419 = vmatprep.subr.bf16.mxu0 0
        %1420 = vmatpush2.bf16.msra.mxu0 0
        %1421 = vmatprep.subr.bf16.mxu0 0
        %1422 = vmatpush2.bf16.msra.mxu0 0
        %1423 = vmatprep.subr.bf16.mxu0 0
        %1424 = vmatpush2.bf16.msra.mxu0 0
        %1425 = vmatprep.subr.bf16.mxu0 0
        %1426 = vmatpush2.bf16.msra.mxu0 0
        %1427 = vmatprep.mubr.bf16.mxu0 0
        %1428 = vmatmul.mubr.bf16.gmra.mxu0 %v1206
        %v1429 = vpop.f32.mrf.mxu0
        %v1430 = vadd.f32 %v1389, %v1429
        %v1431 = vpop.f32.mrf.mxu0
        %v1432 = vpop.f32.mrf.mxu0
        %v1433 = vadd.f32 %v1392, %v1432
        %v1434 = vpop.f32.mrf.mxu0
        %1435 = vdwg.mxu0
        %v1436 = vmax.f32 %v1430, 0.0
        %v1437 = vmax.f32 %v1433, 0.0
        %1438 = vst [vmem:[%s286] sm:$0xff] %v1436
        %1439 = vst [vmem:[%s286 + $0x8] sm:$0xff] %v1437
        %s1440 = sand.u32 %s142, 1
        %s1441 = scalar_lea.sflag [#allocation8], %s1440
        %s1442 = sand.u32 %s142, 1
        %s1443 = smul.addr %s1442, 16
        %s1444 = scalar_lea.vmem [#allocation14], %s1443
        // Predicated region
        $region57: #{tpu_custom_call.1} parent=39 // pred_check
          %p1445 = pneg %p152
        $region58: #{tpu_custom_call.1} parent=39 // pred_check_branch
          %1447 = sbr.rel (%p1445) target = $region60
        $region59: #{tpu_custom_call.1} parent=39 // pred_region
          %s1449 = ssub.s32 256, 256
          %1450 = vsyncadd %s1441, %s1449
          %s1451 = smul.addr %s24, 2
          %s1452 = smul.addr %s1451, 128
          %s1453 = scalar_lea.hbm %s5, %s1452
          %s1454 = sshll.u32 %s1444, 4
          %s1455 = int_to_ptr.vmem [resolvable:$true] %s1454
          %1460 = dma.vmem_to_hbm [thread:$0]  %s1455, 256, %s1453, %s1441, 128, 128, 8
        $region60: #{tpu_custom_call.1} parent=39 // pred_fallthru
          _
      $region40: #{tpu_custom_call.1} parent=5 // pred_fallthru
        _
      %p1461 = scmp.le.s32.totalorder 2, %s19
      // Predicated region
      $region61: #{tpu_custom_call.1} parent=5 // pred_check
        %p1462 = pneg %p1461
      $region62: #{tpu_custom_call.1} parent=5 // pred_check_branch
        %1464 = sbr.rel (%p1462) target = $region64
      $region63: #{tpu_custom_call.1} parent=5 // pred_region
        %s1465 = ssub.s32 %s19, 2
        // Predicated region
        $region65: #{tpu_custom_call.1} parent=63 // pred_check
          %p1466 = pneg %p158
        $region66: #{tpu_custom_call.1} parent=63 // pred_check_branch
          %1468 = sbr.rel (%p1466) target = $region68
        $region67: #{tpu_custom_call.1} parent=63 // pred_region
          %s1469 = sand.u32 %s143, 1
          %s1470 = scalar_lea.sflag [#allocation8], %s1469
          %s1471 = sand.u32 %s143, 1
          %s1472 = smul.addr %s1471, 16
          %s1473 = scalar_lea.vmem [#allocation14], %s1472
          %1474 = dma.done %s1470, 256
        $region68: #{tpu_custom_call.1} parent=63 // pred_fallthru
          _
      $region64: #{tpu_custom_call.1} parent=5 // pred_fallthru
        _
    $region6: #{tpu_custom_call.1} parent=1 // loop_footer
      %s23 = sadd.s32 1, %s19
    $region7: #{tpu_custom_call.1} parent=1 // loop_footer_branch
      %18 = sbr.rel target = $region3
    $region8: #{tpu_custom_call.1} parent=1 // loop_exit
      _
    %1475 = vsyncpa [#allocation7], 1
    %s1476 = scalar_lea.sflag [#allocation7], 1
    %1477 = vsyncpa %s1476, 1
    %1478 = vsyncpa [#allocation10], 1
    %1479 = vsyncpa [#allocation13], 1
    %1480 = vsyncpa [#allocation8], 1
    %s1481 = scalar_lea.sflag [#allocation8], 1
    %1482 = vsyncpa %s1481, 1

</llo_original>
